<compile_context>
chip_gen: v6e
topology: v6e:2x2x1
jax: 0.10.0
libtpu: 0.0.40
codegen_flags: <defaults>
</compile_context>

<pallas_src>
import functools
import math

import jax
import jax.numpy as jnp
from jax.experimental import pallas as pl
from jax.experimental.pallas import tpu as pltpu

_LANE = 128
_SUBLANE = 8
_K = 4                         # independent accumulator vregs (ILP on the reduce)
_ROW_ALIGN = _K * _SUBLANE     # 32: also covers bf16(16)/int8(32) sublane packing
_TILE_BYTES = 2 * 1024 * 1024  # per-input VMEM tile target
_SMALL_TOTAL = 1 << 16         # below this, plain XLA reduction wins


def _round_up(x, m):
    return (x + m - 1) // m * m


def _round_down(x, m):
    return x // m * m


def _tensorcores_per_chip():
    """2 on v7x (megacore split useful), 1 on single-TC chips (v5e/v6e)."""
    try:
        kind = jax.devices()[0].device_kind.lower()
    except Exception:  # pragma: no cover - defensive; default to 1 core
        return 1
    return 2 if ("v7" in kind or "7x" in kind) else 1


def _heatmap_loss_kernel(pred_ref, gt_ref, mask_ref, out_ref, *,
                         block_rows, steps, valid_rows):
    c = pl.program_id(0)   # parallel (TensorCore) axis
    j = pl.program_id(1)   # sequential reduction axis

    @pl.when(j == 0)
    def _():
        out_ref[...] = jnp.zeros_like(out_ref)

    # .astype is a no-op for f32 inputs; keeps bf16 inputs exact.
    d = pred_ref[...].astype(jnp.float32) - gt_ref[...].astype(jnp.float32)
    sq = d * d * mask_ref[...].astype(jnp.float32)

    def _reduce(x):
        # (block_rows, 128) -> (n, K, 8, 128) summed over n: K independent
        # (8,128) accumulators -> plain vreg adds, no XLU, no long dep chain.
        x = x.reshape(block_rows // (_K * _SUBLANE), _K, _SUBLANE, _LANE)
        return jnp.sum(x, axis=0)

    blk = c * steps + j
    row0 = blk * block_rows
    needs_mask = row0 + block_rows > valid_rows

    @pl.when(needs_mask)
    def _():
        # Boundary (or clamped duplicate) block: zero rows outside the real
        # data. Select happens AFTER the arithmetic so NaN/Inf computed on
        # uninitialized VMEM rows is discarded, never 0*Inf'd into the sum.
        row_ids = row0 + jax.lax.broadcasted_iota(
            jnp.int32, (block_rows, _LANE), 0)
        masked = jnp.where(row_ids < valid_rows, sq, 0.0)
        out_ref[...] += _reduce(masked)[None]

    @pl.when(jnp.logical_not(needs_mask))
    def _():
        # Interior block: no masking tax.
        out_ref[...] += _reduce(sq)[None]


def heatmap_loss(pred, gt, mask):
    """Scalar f32 loss matching HeatmapLoss.forward: mean((pred - gt)^2 * mask)."""
    assert pred.shape == gt.shape == mask.shape
    total = math.prod(pred.shape)

    if mask.dtype == jnp.bool_:
        mask = mask.astype(jnp.float32)

    # Tiny-input fast path: kernel launch + grid/pipeline overhead dominates;
    # XLA's fused reduction is already at roofline here.
    if total < _SMALL_TOTAL:
        d = pred.astype(jnp.float32) - gt.astype(jnp.float32)
        return jnp.mean(d * d * mask.astype(jnp.float32))

    p_flat = jnp.reshape(pred, (-1,))
    g_flat = jnp.reshape(gt, (-1,))
    m_flat = jnp.reshape(mask, (-1,))

    # Kernel handles the lane-aligned prefix; the <128-element tail is summed
    # in the wrapper (no jnp.pad HBM copy of all three arrays).
    main = _round_down(total, _LANE)
    rows = main // _LANE

    def _as_slab(x):
        if main != total:
            x = x[:main]
        return jnp.reshape(x, (rows, _LANE))

    p2, g2, m2 = _as_slab(p_flat), _as_slab(g_flat), _as_slab(m_flat)

    itemsize = max(p2.dtype.itemsize, g2.dtype.itemsize, m2.dtype.itemsize)
    max_rows = _round_down(_TILE_BYTES // (_LANE * itemsize), _ROW_ALIGN)
    block_rows = min(max_rows, _round_down(rows, _ROW_ALIGN))
    num_blocks = pl.cdiv(rows, block_rows)

    npar = _tensorcores_per_chip()
    if num_blocks < npar:
        npar = 1
    if npar > 1 and num_blocks % npar:
        # Prefer an even split across cores over re-fetching a duplicate tail
        # block on the second core.
        alt_rows = _round_up(pl.cdiv(rows, num_blocks + 1), _ROW_ALIGN)
        if alt_rows >= _ROW_ALIGN and pl.cdiv(rows, alt_rows) % npar == 0:
            block_rows = alt_rows
            num_blocks = pl.cdiv(rows, alt_rows)

    steps = pl.cdiv(num_blocks, npar)
    if steps * npar == num_blocks:
        in_map = lambda c, j: (c * steps + j, 0)
    else:
        # Clamp so the auto-DMA never walks past the last block; the duplicate
        # block read by the tail core is fully masked out inside the kernel.
        in_map = lambda c, j: (jnp.minimum(c * steps + j, num_blocks - 1), 0)

    kernel = functools.partial(
        _heatmap_loss_kernel,
        block_rows=block_rows, steps=steps, valid_rows=rows)

    bytes_accessed = (p2.size * p2.dtype.itemsize
                      + g2.size * g2.dtype.itemsize
                      + m2.size * m2.dtype.itemsize
                      + npar * _K * _SUBLANE * _LANE * 4)
    cost = pl.CostEstimate(flops=4 * main, transcendentals=0,
                           bytes_accessed=bytes_accessed)

    partials = pl.pallas_call(
        kernel,
        out_shape=jax.ShapeDtypeStruct((npar, _K, _SUBLANE, _LANE), jnp.float32),
        grid_spec=pltpu.PrefetchScalarGridSpec(
            num_scalar_prefetch=0,
            grid=(npar, steps),
            in_specs=[pl.BlockSpec((block_rows, _LANE), in_map)
                      for _ in range(3)],
            out_specs=pl.BlockSpec((1, _K, _SUBLANE, _LANE),
                                   lambda c, j: (c, 0, 0, 0)),
        ),
        compiler_params=pltpu.CompilerParams(
            dimension_semantics=("parallel", "arbitrary"),
            vmem_limit_bytes=32 * 1024 * 1024,
        ),
        cost_estimate=cost,
    )(p2, g2, m2)

    # Single tiny cross-lane collapse + normalization outside the kernel.
    acc = jnp.sum(partials)
    if main != total:
        pt = p_flat[main:].astype(jnp.float32)
        gt_t = g_flat[main:].astype(jnp.float32)
        mt = m_flat[main:].astype(jnp.float32)
        acc = acc + jnp.sum((pt - gt_t) ** 2 * mt)
    return acc / jnp.float32(total)


if __name__ == "__main__":
    root_key = jax.random.PRNGKey(0)

    def _make(shape, dtype, key):
        kp, kg, km = jax.random.split(key, 3)
        pred = jax.random.normal(kp, shape, dtype=jnp.float32).astype(dtype)
        gt = jax.random.normal(kg, shape, dtype=jnp.float32).astype(dtype)
        mask = (jax.random.uniform(km, shape) > 0.5).astype(jnp.float32)
        return pred, gt, mask

    def _ref(pred, gt, mask):
        d = pred.astype(jnp.float32) - gt.astype(jnp.float32)
        return jnp.mean(d * d * mask.astype(jnp.float32))

    cases = [
        ((2, 4, 16, 16), jnp.float32),    # module-sized input: fast path
        ((2, 16, 64, 64), jnp.float32),   # kernel path, lane-aligned total
        ((3, 17, 41, 37), jnp.float32),   # kernel path, ragged total (wrapper tail)
        ((2, 16, 64, 64), jnp.bfloat16),  # kernel path, bf16 inputs
    ]
    keys = jax.random.split(root_key, len(cases))
    for (shape, dtype), k in zip(cases, keys):
        pred, gt, mask = _make(shape, dtype, k)
        loss = heatmap_loss(pred, gt, mask)
        jax.block_until_ready(loss)
        ref = _ref(pred, gt, mask)
        assert jnp.allclose(loss, ref, rtol=1e-4, atol=1e-6), (shape, dtype, loss, ref)

    print("KERNEL_OK")
</pallas_src>

<mosaic_0001>
module attributes {stable_mosaic.version = 11 : i64} {
  func.func @_heatmap_loss_kernel(%arg0: i32, %arg1: i32, %arg2: memref<1024x128xf32, #tpu.memory_space<vmem>>, %arg3: memref<1024x128xf32, #tpu.memory_space<vmem>>, %arg4: memref<1024x128xf32, #tpu.memory_space<vmem>>, %arg5: memref<1x4x8x128xf32, #tpu.memory_space<vmem>>) attributes {dimension_semantics = [#tpu.dimension_semantics<parallel>, #tpu.dimension_semantics<arbitrary>], iteration_bounds = array<i64: 1, 1>, scalar_prefetch = 0 : i64, scratch_operands = 0 : i64, tpu.core_type = #tpu.core_type<tc>, window_params = [{transform_indices = @transform_0, window_bounds = array<i64: 1024, 128>}, {transform_indices = @transform_1, window_bounds = array<i64: 1024, 128>}, {transform_indices = @transform_2, window_bounds = array<i64: 1024, 128>}, {transform_indices = @transform_3, window_bounds = array<i64: 1, 4, 8, 128>}]} {
    %c0_i32 = arith.constant 0 : i32
    %0 = arith.cmpi eq, %arg1, %c0_i32 : i32
    %1 = arith.extui %0 : i1 to i32
    %c0_i32_0 = arith.constant 0 : i32
    %2 = arith.cmpi ne, %1, %c0_i32_0 : i32
    scf.if %2 {
      %cst = arith.constant 0.000000e+00 : f32
      %19 = vector.broadcast %cst : f32 to vector<1x4x8x128xf32>
      %c0_10 = arith.constant 0 : index
      %c0_11 = arith.constant 0 : index
      %c0_12 = arith.constant 0 : index
      %c0_13 = arith.constant 0 : index
      %20 = vector.load %arg5[%c0_10, %c0_11, %c0_12, %c0_13] : memref<1x4x8x128xf32, #tpu.memory_space<vmem>>, vector<1x4x8x128xf32>
      tpu.vector_store %arg5[%c0_10, %c0_11, %c0_12, %c0_13], %19 {strides = array<i32>} : memref<1x4x8x128xf32, #tpu.memory_space<vmem>>, vector<1x4x8x128xf32>,
    } else {
    }
    %c0 = arith.constant 0 : index
    %c0_1 = arith.constant 0 : index
    %3 = vector.load %arg2[%c0, %c0_1] : memref<1024x128xf32, #tpu.memory_space<vmem>>, vector<1024x128xf32>
    %c0_2 = arith.constant 0 : index
    %c0_3 = arith.constant 0 : index
    %4 = vector.load %arg3[%c0_2, %c0_3] : memref<1024x128xf32, #tpu.memory_space<vmem>>, vector<1024x128xf32>
    %5 = arith.subf %3, %4 : vector<1024x128xf32>
    %6 = arith.mulf %5, %5 : vector<1024x128xf32>
    %c0_4 = arith.constant 0 : index
    %c0_5 = arith.constant 0 : index
    %7 = vector.load %arg4[%c0_4, %c0_5] : memref<1024x128xf32, #tpu.memory_space<vmem>>, vector<1024x128xf32>
    %8 = arith.mulf %6, %7 : vector<1024x128xf32>
    %c1_i32 = arith.constant 1 : i32
    %9 = arith.muli %arg0, %c1_i32 : i32
    %10 = arith.addi %9, %arg1 : i32
    %c1024_i32 = arith.constant 1024 : i32
    %11 = arith.muli %10, %c1024_i32 : i32
    %c1024_i32_6 = arith.constant 1024 : i32
    %12 = arith.addi %11, %c1024_i32_6 : i32
    %c1024_i32_7 = arith.constant 1024 : i32
    %13 = arith.cmpi sgt, %12, %c1024_i32_7 : i32
    %14 = arith.extui %13 : i1 to i32
    %c0_i32_8 = arith.constant 0 : i32
    %15 = arith.cmpi ne, %14, %c0_i32_8 : i32
    scf.if %15 {
      %19 = tpu.iota {dimensions = array<i32: 0>} : vector<1024x128xi32>
      %20 = vector.broadcast %11 : i32 to vector<1024x128xi32>
      %21 = arith.addi %20, %19 : vector<1024x128xi32>
      %c1024_i32_10 = arith.constant 1024 : i32
      %22 = vector.broadcast %c1024_i32_10 : i32 to vector<1024x128xi32>
      %23 = arith.cmpi slt, %21, %22 : vector<1024x128xi32>
      %cst = arith.constant 0.000000e+00 : f32
      %24 = vector.broadcast %cst : f32 to vector<1024x128xf32>
      %25 = arith.select %23, %8, %24 : vector<1024x128xi1>, vector<1024x128xf32>
      %c0_11 = arith.constant 0 : index
      %c0_12 = arith.constant 0 : index
      %c0_13 = arith.constant 0 : index
      %c0_14 = arith.constant 0 : index
      %26 = vector.load %arg5[%c0_11, %c0_12, %c0_13, %c0_14] : memref<1x4x8x128xf32, #tpu.memory_space<vmem>>, vector<1x4x8x128xf32>
      %27 = vector.shape_cast %25 : vector<1024x128xf32> to vector<32x4x8x128xf32>
      %cst_15 = arith.constant dense<0.000000e+00> : vector<4x8x128xf32>
      %28 = vector.multi_reduction <add>, %27, %cst_15 [0] : vector<32x4x8x128xf32> to vector<4x8x128xf32>
      %29 = vector.shape_cast %28 : vector<4x8x128xf32> to vector<1x4x8x128xf32>
      %30 = arith.addf %26, %29 : vector<1x4x8x128xf32>
      %c0_16 = arith.constant 0 : index
      %c0_17 = arith.constant 0 : index
      %c0_18 = arith.constant 0 : index
      %c0_19 = arith.constant 0 : index
      %31 = vector.load %arg5[%c0_16, %c0_17, %c0_18, %c0_19] : memref<1x4x8x128xf32, #tpu.memory_space<vmem>>, vector<1x4x8x128xf32>
      tpu.vector_store %arg5[%c0_16, %c0_17, %c0_18, %c0_19], %30 {strides = array<i32>} : memref<1x4x8x128xf32, #tpu.memory_space<vmem>>, vector<1x4x8x128xf32>,
    } else {
    }
    %true = arith.constant true
    %16 = arith.xori %13, %true : i1
    %17 = arith.extui %16 : i1 to i32
    %c0_i32_9 = arith.constant 0 : i32
    %18 = arith.cmpi ne, %17, %c0_i32_9 : i32
    scf.if %18 {
      %c0_10 = arith.constant 0 : index
      %c0_11 = arith.constant 0 : index
      %c0_12 = arith.constant 0 : index
      %c0_13 = arith.constant 0 : index
      %19 = vector.load %arg5[%c0_10, %c0_11, %c0_12, %c0_13] : memref<1x4x8x128xf32, #tpu.memory_space<vmem>>, vector<1x4x8x128xf32>
      %20 = vector.shape_cast %8 : vector<1024x128xf32> to vector<32x4x8x128xf32>
      %cst = arith.constant dense<0.000000e+00> : vector<4x8x128xf32>
      %21 = vector.multi_reduction <add>, %20, %cst [0] : vector<32x4x8x128xf32> to vector<4x8x128xf32>
      %22 = vector.shape_cast %21 : vector<4x8x128xf32> to vector<1x4x8x128xf32>
      %23 = arith.addf %19, %22 : vector<1x4x8x128xf32>
      %c0_14 = arith.constant 0 : index
      %c0_15 = arith.constant 0 : index
      %c0_16 = arith.constant 0 : index
      %c0_17 = arith.constant 0 : index
      %24 = vector.load %arg5[%c0_14, %c0_15, %c0_16, %c0_17] : memref<1x4x8x128xf32, #tpu.memory_space<vmem>>, vector<1x4x8x128xf32>
      tpu.vector_store %arg5[%c0_14, %c0_15, %c0_16, %c0_17], %23 {strides = array<i32>} : memref<1x4x8x128xf32, #tpu.memory_space<vmem>>, vector<1x4x8x128xf32>,
    } else {
    }
    return
  }
  func.func @transform_0(%arg0: i32, %arg1: i32) -> (i32, i32) {
    %c1_i32 = arith.constant 1 : i32
    %0 = arith.muli %arg0, %c1_i32 : i32
    %1 = arith.addi %0, %arg1 : i32
    %c0_i32 = arith.constant 0 : i32
    %c0_i32_0 = arith.constant 0 : i32
    return %1, %c0_i32 : i32, i32
  }
  func.func @transform_1(%arg0: i32, %arg1: i32) -> (i32, i32) {
    %c1_i32 = arith.constant 1 : i32
    %0 = arith.muli %arg0, %c1_i32 : i32
    %1 = arith.addi %0, %arg1 : i32
    %c0_i32 = arith.constant 0 : i32
    %c0_i32_0 = arith.constant 0 : i32
    return %1, %c0_i32 : i32, i32
  }
  func.func @transform_2(%arg0: i32, %arg1: i32) -> (i32, i32) {
    %c1_i32 = arith.constant 1 : i32
    %0 = arith.muli %arg0, %c1_i32 : i32
    %1 = arith.addi %0, %arg1 : i32
    %c0_i32 = arith.constant 0 : i32
    %c0_i32_0 = arith.constant 0 : i32
    return %1, %c0_i32 : i32, i32
  }
  func.func @transform_3(%arg0: i32, %arg1: i32) -> (i32, i32, i32, i32) {
    %c0_i32 = arith.constant 0 : i32
    %c0_i32_0 = arith.constant 0 : i32
    %c0_i32_1 = arith.constant 0 : i32
    %c0_i32_2 = arith.constant 0 : i32
    return %arg0, %c0_i32, %c0_i32_0, %c0_i32_1 : i32, i32, i32, i32
  }
}

</mosaic_0001>

<llo_original>
// kernel: tpu_custom_call.1
$region0: #{tpu_custom_call.1}
  #allocation0 [shape = 'u32[]', space=smem, size = 0x4, offset = 0x4, fixed_abs, tag = 'smem constant byte address 0x4 - core index']
  #allocation1 [shape = 'u32[144,128]{1,0:T(1,128)}', space=vmem, size = 0x12000, scoped, tag = 'internal scratch']
  %s0 = inlined_call_operand.hbm [shape: f32[1024,128], index: 0, kind: input, shape index: {}]
  %s1 = inlined_call_operand.hbm [shape: f32[1024,128], index: 1, kind: input, shape index: {}]
  %s2 = inlined_call_operand.hbm [shape: f32[1024,128], index: 2, kind: input, shape index: {}]
  %s3 = inlined_call_operand.hbm [shape: f32[1,4,8,128], index: 3, kind: output, shape index: {}]
  %s4 = sld [smem:[#allocation0]]
  $region46: #{tpu_custom_call.1} parent=0
    _
  %s6 = ssub.s32 1, %s4
  %s7 = scalar_select 0, %s6, %s4
  $region1: #{tpu_custom_call.1} parent=0
    #allocation2 [shape = 'u8[524288]{0}', space=vmem, size = 0x80000, scoped, tag = 'input window, operand 0, single buffered']
    #allocation3 [shape = 's32[1]{0}', space=sflag, size = 0x4, scoped, tag = 'scoped memory for tpu_custom_call.1']
    #allocation4 [shape = 's32[1]{0}', space=sflag, size = 0x4, scoped, tag = 'scoped memory for tpu_custom_call.1']
    #allocation5 [shape = 'u8[524288]{0}', space=vmem, size = 0x80000, scoped, tag = 'input window, operand 1, single buffered']
    #allocation6 [shape = 's32[1]{0}', space=sflag, size = 0x4, scoped, tag = 'scoped memory for tpu_custom_call.1']
    #allocation7 [shape = 'u8[524288]{0}', space=vmem, size = 0x80000, scoped, tag = 'input window, operand 2, single buffered']
    #allocation8 [shape = 'u8[16384]{0}', space=vmem, size = 0x4000, scoped, tag = 'output window, operand 0, single buffered']
    %8 = vsyncpa [#allocation3], 0
    %9 = vsyncpa [#allocation6], 0
    %10 = vsyncpa [#allocation4], 0
    // Predicated region
    $region2: #{tpu_custom_call.1} parent=1 // pred_check
      _
    $region3: #{tpu_custom_call.1} parent=1 // pred_check_branch
      %12 = sbr.rel (0) target = $region5
    $region4: #{tpu_custom_call.1} parent=1 // pred_region
      %s13 = sadd.s32 0, 0
      %s14 = smul.u32 128, %s13
      %s16 = ssub.s32 16384, 16384
      %17 = vsyncadd [#allocation3], %s16
      %s18 = smul.addr %s14, 128
      %s19 = scalar_lea.hbm %s0, %s18
      %s20 = sshll.u32 [#allocation2], 4
      %s21 = int_to_ptr.vmem [resolvable:$true] %s20
      %26 = dma.hbm_to_vmem [thread:$0]  %s19, 16384, %s21, [#allocation3], 128, 128, 8
    $region5: #{tpu_custom_call.1} parent=1 // pred_fallthru
      _
    // Predicated region
    $region6: #{tpu_custom_call.1} parent=1 // pred_check
      _
    $region7: #{tpu_custom_call.1} parent=1 // pred_check_branch
      %28 = sbr.rel (0) target = $region9
    $region8: #{tpu_custom_call.1} parent=1 // pred_region
      %s29 = sadd.s32 0, 0
      %s30 = smul.u32 128, %s29
      %s32 = ssub.s32 16384, 16384
      %33 = vsyncadd [#allocation6], %s32
      %s34 = smul.addr %s30, 128
      %s35 = scalar_lea.hbm %s1, %s34
      %s36 = sshll.u32 [#allocation5], 4
      %s37 = int_to_ptr.vmem [resolvable:$true] %s36
      %42 = dma.hbm_to_vmem [thread:$0]  %s35, 16384, %s37, [#allocation6], 128, 128, 8
    $region9: #{tpu_custom_call.1} parent=1 // pred_fallthru
      _
    // Predicated region
    $region10: #{tpu_custom_call.1} parent=1 // pred_check
      _
    $region11: #{tpu_custom_call.1} parent=1 // pred_check_branch
      %44 = sbr.rel (0) target = $region13
    $region12: #{tpu_custom_call.1} parent=1 // pred_region
      %s45 = sadd.s32 0, 0
      %s46 = smul.u32 128, %s45
      %s48 = ssub.s32 16384, 16384
      %49 = vsyncadd [#allocation6], %s48
      %s50 = smul.addr %s46, 128
      %s51 = scalar_lea.hbm %s2, %s50
      %s52 = sshll.u32 [#allocation7], 4
      %s53 = int_to_ptr.vmem [resolvable:$true] %s52
      %58 = dma.hbm_to_vmem [thread:$0]  %s51, 16384, %s53, [#allocation6], 128, 128, 8
    $region13: #{tpu_custom_call.1} parent=1 // pred_fallthru
      _
    // Predicated region
    $region14: #{tpu_custom_call.1} parent=1 // pred_check
      _
    $region15: #{tpu_custom_call.1} parent=1 // pred_check_branch
      %60 = sbr.rel (0) target = $region17
    $region16: #{tpu_custom_call.1} parent=1 // pred_region
      %61 = dma.done [#allocation3], 16384
    $region17: #{tpu_custom_call.1} parent=1 // pred_fallthru
      _
    // Predicated region
    $region18: #{tpu_custom_call.1} parent=1 // pred_check
      _
    $region19: #{tpu_custom_call.1} parent=1 // pred_check_branch
      %63 = sbr.rel (0) target = $region21
    $region20: #{tpu_custom_call.1} parent=1 // pred_region
      %64 = dma.done [#allocation6], 16384
    $region21: #{tpu_custom_call.1} parent=1 // pred_fallthru
      _
    // Predicated region
    $region22: #{tpu_custom_call.1} parent=1 // pred_check
      _
    $region23: #{tpu_custom_call.1} parent=1 // pred_check_branch
      %66 = sbr.rel (0) target = $region25
    $region24: #{tpu_custom_call.1} parent=1 // pred_region
      %67 = dma.done [#allocation6], 16384
    $region25: #{tpu_custom_call.1} parent=1 // pred_fallthru
      _
    %s68 = sadd.s32 0, 0
    %s69 = smul.u32 128, %s68
    %s70 = sadd.s32 0, 0
    %s71 = smul.u32 128, %s70
    %s72 = sadd.s32 0, 0
    %s73 = smul.u32 128, %s72
    %p74 = scmp.eq.s32.totalorder 0, 0
    // Predicated region
    $region26: #{tpu_custom_call.1} parent=1 // pred_check
      %p75 = pneg %p74
    $region27: #{tpu_custom_call.1} parent=1 // pred_check_branch
      %77 = sbr.rel (%p75) target = $region29
    $region28: #{tpu_custom_call.1} parent=1 // pred_region
      %78 = vst [vmem:[#allocation8] sm:$0xff] 0.0
      %79 = vst [vmem:[#allocation8 + $0x8] sm:$0xff] 0.0
      %80 = vst [vmem:[#allocation8 + $0x10] sm:$0xff] 0.0
      %81 = vst [vmem:[#allocation8 + $0x18] sm:$0xff] 0.0
    $region29: #{tpu_custom_call.1} parent=1 // pred_fallthru
      _
    %v82 = vld [vmem:[#allocation2] sm:$0xff]
    %v83 = vld [vmem:[#allocation2 + $0x8] sm:$0xff]
    %v84 = vld [vmem:[#allocation2 + $0x10] sm:$0xff]
    %v85 = vld [vmem:[#allocation2 + $0x18] sm:$0xff]
    %v86 = vld [vmem:[#allocation2 + $0x20] sm:$0xff]
    %v87 = vld [vmem:[#allocation2 + $0x28] sm:$0xff]
    %v88 = vld [vmem:[#allocation2 + $0x30] sm:$0xff]
    %v89 = vld [vmem:[#allocation2 + $0x38] sm:$0xff]
    %v90 = vld [vmem:[#allocation2 + $0x40] sm:$0xff]
    %v91 = vld [vmem:[#allocation2 + $0x48] sm:$0xff]
    %v92 = vld [vmem:[#allocation2 + $0x50] sm:$0xff]
    %v93 = vld [vmem:[#allocation2 + $0x58] sm:$0xff]
    %v94 = vld [vmem:[#allocation2 + $0x60] sm:$0xff]
    %v95 = vld [vmem:[#allocation2 + $0x68] sm:$0xff]
    %v96 = vld [vmem:[#allocation2 + $0x70] sm:$0xff]
    %v97 = vld [vmem:[#allocation2 + $0x78] sm:$0xff]
    %v98 = vld [vmem:[#allocation2 + $0x80] sm:$0xff]
    %v99 = vld [vmem:[#allocation2 + $0x88] sm:$0xff]
    %v100 = vld [vmem:[#allocation2 + $0x90] sm:$0xff]
    %v101 = vld [vmem:[#allocation2 + $0x98] sm:$0xff]
    %v102 = vld [vmem:[#allocation2 + $0xa0] sm:$0xff]
    %v103 = vld [vmem:[#allocation2 + $0xa8] sm:$0xff]
    %v104 = vld [vmem:[#allocation2 + $0xb0] sm:$0xff]
    %v105 = vld [vmem:[#allocation2 + $0xb8] sm:$0xff]
    %v106 = vld [vmem:[#allocation2 + $0xc0] sm:$0xff]
    %v107 = vld [vmem:[#allocation2 + $0xc8] sm:$0xff]
    %v108 = vld [vmem:[#allocation2 + $0xd0] sm:$0xff]
    %v109 = vld [vmem:[#allocation2 + $0xd8] sm:$0xff]
    %v110 = vld [vmem:[#allocation2 + $0xe0] sm:$0xff]
    %v111 = vld [vmem:[#allocation2 + $0xe8] sm:$0xff]
    %v112 = vld [vmem:[#allocation2 + $0xf0] sm:$0xff]
    %v113 = vld [vmem:[#allocation2 + $0xf8] sm:$0xff]
    %v114 = vld [vmem:[#allocation2 + $0x100] sm:$0xff]
    %v115 = vld [vmem:[#allocation2 + $0x108] sm:$0xff]
    %v116 = vld [vmem:[#allocation2 + $0x110] sm:$0xff]
    %v117 = vld [vmem:[#allocation2 + $0x118] sm:$0xff]
    %v118 = vld [vmem:[#allocation2 + $0x120] sm:$0xff]
    %v119 = vld [vmem:[#allocation2 + $0x128] sm:$0xff]
    %v120 = vld [vmem:[#allocation2 + $0x130] sm:$0xff]
    %v121 = vld [vmem:[#allocation2 + $0x138] sm:$0xff]
    %v122 = vld [vmem:[#allocation2 + $0x140] sm:$0xff]
    %v123 = vld [vmem:[#allocation2 + $0x148] sm:$0xff]
    %v124 = vld [vmem:[#allocation2 + $0x150] sm:$0xff]
    %v125 = vld [vmem:[#allocation2 + $0x158] sm:$0xff]
    %v126 = vld [vmem:[#allocation2 + $0x160] sm:$0xff]
    %v127 = vld [vmem:[#allocation2 + $0x168] sm:$0xff]
    %v128 = vld [vmem:[#allocation2 + $0x170] sm:$0xff]
    %v129 = vld [vmem:[#allocation2 + $0x178] sm:$0xff]
    %v130 = vld [vmem:[#allocation2 + $0x180] sm:$0xff]
    %v131 = vld [vmem:[#allocation2 + $0x188] sm:$0xff]
    %v132 = vld [vmem:[#allocation2 + $0x190] sm:$0xff]
    %v133 = vld [vmem:[#allocation2 + $0x198] sm:$0xff]
    %v134 = vld [vmem:[#allocation2 + $0x1a0] sm:$0xff]
    %v135 = vld [vmem:[#allocation2 + $0x1a8] sm:$0xff]
    %v136 = vld [vmem:[#allocation2 + $0x1b0] sm:$0xff]
    %v137 = vld [vmem:[#allocation2 + $0x1b8] sm:$0xff]
    %v138 = vld [vmem:[#allocation2 + $0x1c0] sm:$0xff]
    %v139 = vld [vmem:[#allocation2 + $0x1c8] sm:$0xff]
    %v140 = vld [vmem:[#allocation2 + $0x1d0] sm:$0xff]
    %v141 = vld [vmem:[#allocation2 + $0x1d8] sm:$0xff]
    %v142 = vld [vmem:[#allocation2 + $0x1e0] sm:$0xff]
    %v143 = vld [vmem:[#allocation2 + $0x1e8] sm:$0xff]
    %v144 = vld [vmem:[#allocation2 + $0x1f0] sm:$0xff]
    %v145 = vld [vmem:[#allocation2 + $0x1f8] sm:$0xff]
    %v146 = vld [vmem:[#allocation2 + $0x200] sm:$0xff]
    %v147 = vld [vmem:[#allocation2 + $0x208] sm:$0xff]
    %v148 = vld [vmem:[#allocation2 + $0x210] sm:$0xff]
    %v149 = vld [vmem:[#allocation2 + $0x218] sm:$0xff]
    %v150 = vld [vmem:[#allocation2 + $0x220] sm:$0xff]
    %v151 = vld [vmem:[#allocation2 + $0x228] sm:$0xff]
    %v152 = vld [vmem:[#allocation2 + $0x230] sm:$0xff]
    %v153 = vld [vmem:[#allocation2 + $0x238] sm:$0xff]
    %v154 = vld [vmem:[#allocation2 + $0x240] sm:$0xff]
    %v155 = vld [vmem:[#allocation2 + $0x248] sm:$0xff]
    %v156 = vld [vmem:[#allocation2 + $0x250] sm:$0xff]
    %v157 = vld [vmem:[#allocation2 + $0x258] sm:$0xff]
    %v158 = vld [vmem:[#allocation2 + $0x260] sm:$0xff]
    %v159 = vld [vmem:[#allocation2 + $0x268] sm:$0xff]
    %v160 = vld [vmem:[#allocation2 + $0x270] sm:$0xff]
    %v161 = vld [vmem:[#allocation2 + $0x278] sm:$0xff]
    %v162 = vld [vmem:[#allocation2 + $0x280] sm:$0xff]
    %v163 = vld [vmem:[#allocation2 + $0x288] sm:$0xff]
    %v164 = vld [vmem:[#allocation2 + $0x290] sm:$0xff]
    %v165 = vld [vmem:[#allocation2 + $0x298] sm:$0xff]
    %v166 = vld [vmem:[#allocation2 + $0x2a0] sm:$0xff]
    %v167 = vld [vmem:[#allocation2 + $0x2a8] sm:$0xff]
    %v168 = vld [vmem:[#allocation2 + $0x2b0] sm:$0xff]
    %v169 = vld [vmem:[#allocation2 + $0x2b8] sm:$0xff]
    %v170 = vld [vmem:[#allocation2 + $0x2c0] sm:$0xff]
    %v171 = vld [vmem:[#allocation2 + $0x2c8] sm:$0xff]
    %v172 = vld [vmem:[#allocation2 + $0x2d0] sm:$0xff]
    %v173 = vld [vmem:[#allocation2 + $0x2d8] sm:$0xff]
    %v174 = vld [vmem:[#allocation2 + $0x2e0] sm:$0xff]
    %v175 = vld [vmem:[#allocation2 + $0x2e8] sm:$0xff]
    %v176 = vld [vmem:[#allocation2 + $0x2f0] sm:$0xff]
    %v177 = vld [vmem:[#allocation2 + $0x2f8] sm:$0xff]
    %v178 = vld [vmem:[#allocation2 + $0x300] sm:$0xff]
    %v179 = vld [vmem:[#allocation2 + $0x308] sm:$0xff]
    %v180 = vld [vmem:[#allocation2 + $0x310] sm:$0xff]
    %v181 = vld [vmem:[#allocation2 + $0x318] sm:$0xff]
    %v182 = vld [vmem:[#allocation2 + $0x320] sm:$0xff]
    %v183 = vld [vmem:[#allocation2 + $0x328] sm:$0xff]
    %v184 = vld [vmem:[#allocation2 + $0x330] sm:$0xff]
    %v185 = vld [vmem:[#allocation2 + $0x338] sm:$0xff]
    %v186 = vld [vmem:[#allocation2 + $0x340] sm:$0xff]
    %v187 = vld [vmem:[#allocation2 + $0x348] sm:$0xff]
    %v188 = vld [vmem:[#allocation2 + $0x350] sm:$0xff]
    %v189 = vld [vmem:[#allocation2 + $0x358] sm:$0xff]
    %v190 = vld [vmem:[#allocation2 + $0x360] sm:$0xff]
    %v191 = vld [vmem:[#allocation2 + $0x368] sm:$0xff]
    %v192 = vld [vmem:[#allocation2 + $0x370] sm:$0xff]
    %v193 = vld [vmem:[#allocation2 + $0x378] sm:$0xff]
    %v194 = vld [vmem:[#allocation2 + $0x380] sm:$0xff]
    %v195 = vld [vmem:[#allocation2 + $0x388] sm:$0xff]
    %v196 = vld [vmem:[#allocation2 + $0x390] sm:$0xff]
    %v197 = vld [vmem:[#allocation2 + $0x398] sm:$0xff]
    %v198 = vld [vmem:[#allocation2 + $0x3a0] sm:$0xff]
    %v199 = vld [vmem:[#allocation2 + $0x3a8] sm:$0xff]
    %v200 = vld [vmem:[#allocation2 + $0x3b0] sm:$0xff]
    %v201 = vld [vmem:[#allocation2 + $0x3b8] sm:$0xff]
    %v202 = vld [vmem:[#allocation2 + $0x3c0] sm:$0xff]
    %v203 = vld [vmem:[#allocation2 + $0x3c8] sm:$0xff]
    %v204 = vld [vmem:[#allocation2 + $0x3d0] sm:$0xff]
    %v205 = vld [vmem:[#allocation2 + $0x3d8] sm:$0xff]
    %v206 = vld [vmem:[#allocation2 + $0x3e0] sm:$0xff]
    %v207 = vld [vmem:[#allocation2 + $0x3e8] sm:$0xff]
    %v208 = vld [vmem:[#allocation2 + $0x3f0] sm:$0xff]
    %v209 = vld [vmem:[#allocation2 + $0x3f8] sm:$0xff]
    %v210 = vld [vmem:[#allocation5] sm:$0xff]
    %v211 = vld [vmem:[#allocation5 + $0x8] sm:$0xff]
    %v212 = vld [vmem:[#allocation5 + $0x10] sm:$0xff]
    %v213 = vld [vmem:[#allocation5 + $0x18] sm:$0xff]
    %v214 = vld [vmem:[#allocation5 + $0x20] sm:$0xff]
    %v215 = vld [vmem:[#allocation5 + $0x28] sm:$0xff]
    %v216 = vld [vmem:[#allocation5 + $0x30] sm:$0xff]
    %v217 = vld [vmem:[#allocation5 + $0x38] sm:$0xff]
    %v218 = vld [vmem:[#allocation5 + $0x40] sm:$0xff]
    %v219 = vld [vmem:[#allocation5 + $0x48] sm:$0xff]
    %v220 = vld [vmem:[#allocation5 + $0x50] sm:$0xff]
    %v221 = vld [vmem:[#allocation5 + $0x58] sm:$0xff]
    %v222 = vld [vmem:[#allocation5 + $0x60] sm:$0xff]
    %v223 = vld [vmem:[#allocation5 + $0x68] sm:$0xff]
    %v224 = vld [vmem:[#allocation5 + $0x70] sm:$0xff]
    %v225 = vld [vmem:[#allocation5 + $0x78] sm:$0xff]
    %v226 = vld [vmem:[#allocation5 + $0x80] sm:$0xff]
    %v227 = vld [vmem:[#allocation5 + $0x88] sm:$0xff]
    %v228 = vld [vmem:[#allocation5 + $0x90] sm:$0xff]
    %v229 = vld [vmem:[#allocation5 + $0x98] sm:$0xff]
    %v230 = vld [vmem:[#allocation5 + $0xa0] sm:$0xff]
    %v231 = vld [vmem:[#allocation5 + $0xa8] sm:$0xff]
    %v232 = vld [vmem:[#allocation5 + $0xb0] sm:$0xff]
    %v233 = vld [vmem:[#allocation5 + $0xb8] sm:$0xff]
    %v234 = vld [vmem:[#allocation5 + $0xc0] sm:$0xff]
    %v235 = vld [vmem:[#allocation5 + $0xc8] sm:$0xff]
    %v236 = vld [vmem:[#allocation5 + $0xd0] sm:$0xff]
    %v237 = vld [vmem:[#allocation5 + $0xd8] sm:$0xff]
    %v238 = vld [vmem:[#allocation5 + $0xe0] sm:$0xff]
    %v239 = vld [vmem:[#allocation5 + $0xe8] sm:$0xff]
    %v240 = vld [vmem:[#allocation5 + $0xf0] sm:$0xff]
    %v241 = vld [vmem:[#allocation5 + $0xf8] sm:$0xff]
    %v242 = vld [vmem:[#allocation5 + $0x100] sm:$0xff]
    %v243 = vld [vmem:[#allocation5 + $0x108] sm:$0xff]
    %v244 = vld [vmem:[#allocation5 + $0x110] sm:$0xff]
    %v245 = vld [vmem:[#allocation5 + $0x118] sm:$0xff]
    %v246 = vld [vmem:[#allocation5 + $0x120] sm:$0xff]
    %v247 = vld [vmem:[#allocation5 + $0x128] sm:$0xff]
    %v248 = vld [vmem:[#allocation5 + $0x130] sm:$0xff]
    %v249 = vld [vmem:[#allocation5 + $0x138] sm:$0xff]
    %v250 = vld [vmem:[#allocation5 + $0x140] sm:$0xff]
    %v251 = vld [vmem:[#allocation5 + $0x148] sm:$0xff]
    %v252 = vld [vmem:[#allocation5 + $0x150] sm:$0xff]
    %v253 = vld [vmem:[#allocation5 + $0x158] sm:$0xff]
    %v254 = vld [vmem:[#allocation5 + $0x160] sm:$0xff]
    %v255 = vld [vmem:[#allocation5 + $0x168] sm:$0xff]
    %v256 = vld [vmem:[#allocation5 + $0x170] sm:$0xff]
    %v257 = vld [vmem:[#allocation5 + $0x178] sm:$0xff]
    %v258 = vld [vmem:[#allocation5 + $0x180] sm:$0xff]
    %v259 = vld [vmem:[#allocation5 + $0x188] sm:$0xff]
    %v260 = vld [vmem:[#allocation5 + $0x190] sm:$0xff]
    %v261 = vld [vmem:[#allocation5 + $0x198] sm:$0xff]
    %v262 = vld [vmem:[#allocation5 + $0x1a0] sm:$0xff]
    %v263 = vld [vmem:[#allocation5 + $0x1a8] sm:$0xff]
    %v264 = vld [vmem:[#allocation5 + $0x1b0] sm:$0xff]
    %v265 = vld [vmem:[#allocation5 + $0x1b8] sm:$0xff]
    %v266 = vld [vmem:[#allocation5 + $0x1c0] sm:$0xff]
    %v267 = vld [vmem:[#allocation5 + $0x1c8] sm:$0xff]
    %v268 = vld [vmem:[#allocation5 + $0x1d0] sm:$0xff]
    %v269 = vld [vmem:[#allocation5 + $0x1d8] sm:$0xff]
    %v270 = vld [vmem:[#allocation5 + $0x1e0] sm:$0xff]
    %v271 = vld [vmem:[#allocation5 + $0x1e8] sm:$0xff]
    %v272 = vld [vmem:[#allocation5 + $0x1f0] sm:$0xff]
    %v273 = vld [vmem:[#allocation5 + $0x1f8] sm:$0xff]
    %v274 = vld [vmem:[#allocation5 + $0x200] sm:$0xff]
    %v275 = vld [vmem:[#allocation5 + $0x208] sm:$0xff]
    %v276 = vld [vmem:[#allocation5 + $0x210] sm:$0xff]
    %v277 = vld [vmem:[#allocation5 + $0x218] sm:$0xff]
    %v278 = vld [vmem:[#allocation5 + $0x220] sm:$0xff]
    %v279 = vld [vmem:[#allocation5 + $0x228] sm:$0xff]
    %v280 = vld [vmem:[#allocation5 + $0x230] sm:$0xff]
    %v281 = vld [vmem:[#allocation5 + $0x238] sm:$0xff]
    %v282 = vld [vmem:[#allocation5 + $0x240] sm:$0xff]
    %v283 = vld [vmem:[#allocation5 + $0x248] sm:$0xff]
    %v284 = vld [vmem:[#allocation5 + $0x250] sm:$0xff]
    %v285 = vld [vmem:[#allocation5 + $0x258] sm:$0xff]
    %v286 = vld [vmem:[#allocation5 + $0x260] sm:$0xff]
    %v287 = vld [vmem:[#allocation5 + $0x268] sm:$0xff]
    %v288 = vld [vmem:[#allocation5 + $0x270] sm:$0xff]
    %v289 = vld [vmem:[#allocation5 + $0x278] sm:$0xff]
    %v290 = vld [vmem:[#allocation5 + $0x280] sm:$0xff]
    %v291 = vld [vmem:[#allocation5 + $0x288] sm:$0xff]
    %v292 = vld [vmem:[#allocation5 + $0x290] sm:$0xff]
    %v293 = vld [vmem:[#allocation5 + $0x298] sm:$0xff]
    %v294 = vld [vmem:[#allocation5 + $0x2a0] sm:$0xff]
    %v295 = vld [vmem:[#allocation5 + $0x2a8] sm:$0xff]
    %v296 = vld [vmem:[#allocation5 + $0x2b0] sm:$0xff]
    %v297 = vld [vmem:[#allocation5 + $0x2b8] sm:$0xff]
    %v298 = vld [vmem:[#allocation5 + $0x2c0] sm:$0xff]
    %v299 = vld [vmem:[#allocation5 + $0x2c8] sm:$0xff]
    %v300 = vld [vmem:[#allocation5 + $0x2d0] sm:$0xff]
    %v301 = vld [vmem:[#allocation5 + $0x2d8] sm:$0xff]
    %v302 = vld [vmem:[#allocation5 + $0x2e0] sm:$0xff]
    %v303 = vld [vmem:[#allocation5 + $0x2e8] sm:$0xff]
    %v304 = vld [vmem:[#allocation5 + $0x2f0] sm:$0xff]
    %v305 = vld [vmem:[#allocation5 + $0x2f8] sm:$0xff]
    %v306 = vld [vmem:[#allocation5 + $0x300] sm:$0xff]
    %v307 = vld [vmem:[#allocation5 + $0x308] sm:$0xff]
    %v308 = vld [vmem:[#allocation5 + $0x310] sm:$0xff]
    %v309 = vld [vmem:[#allocation5 + $0x318] sm:$0xff]
    %v310 = vld [vmem:[#allocation5 + $0x320] sm:$0xff]
    %v311 = vld [vmem:[#allocation5 + $0x328] sm:$0xff]
    %v312 = vld [vmem:[#allocation5 + $0x330] sm:$0xff]
    %v313 = vld [vmem:[#allocation5 + $0x338] sm:$0xff]
    %v314 = vld [vmem:[#allocation5 + $0x340] sm:$0xff]
    %v315 = vld [vmem:[#allocation5 + $0x348] sm:$0xff]
    %v316 = vld [vmem:[#allocation5 + $0x350] sm:$0xff]
    %v317 = vld [vmem:[#allocation5 + $0x358] sm:$0xff]
    %v318 = vld [vmem:[#allocation5 + $0x360] sm:$0xff]
    %v319 = vld [vmem:[#allocation5 + $0x368] sm:$0xff]
    %v320 = vld [vmem:[#allocation5 + $0x370] sm:$0xff]
    %v321 = vld [vmem:[#allocation5 + $0x378] sm:$0xff]
    %v322 = vld [vmem:[#allocation5 + $0x380] sm:$0xff]
    %v323 = vld [vmem:[#allocation5 + $0x388] sm:$0xff]
    %v324 = vld [vmem:[#allocation5 + $0x390] sm:$0xff]
    %v325 = vld [vmem:[#allocation5 + $0x398] sm:$0xff]
    %v326 = vld [vmem:[#allocation5 + $0x3a0] sm:$0xff]
    %v327 = vld [vmem:[#allocation5 + $0x3a8] sm:$0xff]
    %v328 = vld [vmem:[#allocation5 + $0x3b0] sm:$0xff]
    %v329 = vld [vmem:[#allocation5 + $0x3b8] sm:$0xff]
    %v330 = vld [vmem:[#allocation5 + $0x3c0] sm:$0xff]
    %v331 = vld [vmem:[#allocation5 + $0x3c8] sm:$0xff]
    %v332 = vld [vmem:[#allocation5 + $0x3d0] sm:$0xff]
    %v333 = vld [vmem:[#allocation5 + $0x3d8] sm:$0xff]
    %v334 = vld [vmem:[#allocation5 + $0x3e0] sm:$0xff]
    %v335 = vld [vmem:[#allocation5 + $0x3e8] sm:$0xff]
    %v336 = vld [vmem:[#allocation5 + $0x3f0] sm:$0xff]
    %v337 = vld [vmem:[#allocation5 + $0x3f8] sm:$0xff]
    %v338 = vsub.f32 %v82, %v210
    %v339 = vsub.f32 %v83, %v211
    %v340 = vsub.f32 %v84, %v212
    %v341 = vsub.f32 %v85, %v213
    %v342 = vsub.f32 %v86, %v214
    %v343 = vsub.f32 %v87, %v215
    %v344 = vsub.f32 %v88, %v216
    %v345 = vsub.f32 %v89, %v217
    %v346 = vsub.f32 %v90, %v218
    %v347 = vsub.f32 %v91, %v219
    %v348 = vsub.f32 %v92, %v220
    %v349 = vsub.f32 %v93, %v221
    %v350 = vsub.f32 %v94, %v222
    %v351 = vsub.f32 %v95, %v223
    %v352 = vsub.f32 %v96, %v224
    %v353 = vsub.f32 %v97, %v225
    %v354 = vsub.f32 %v98, %v226
    %v355 = vsub.f32 %v99, %v227
    %v356 = vsub.f32 %v100, %v228
    %v357 = vsub.f32 %v101, %v229
    %v358 = vsub.f32 %v102, %v230
    %v359 = vsub.f32 %v103, %v231
    %v360 = vsub.f32 %v104, %v232
    %v361 = vsub.f32 %v105, %v233
    %v362 = vsub.f32 %v106, %v234
    %v363 = vsub.f32 %v107, %v235
    %v364 = vsub.f32 %v108, %v236
    %v365 = vsub.f32 %v109, %v237
    %v366 = vsub.f32 %v110, %v238
    %v367 = vsub.f32 %v111, %v239
    %v368 = vsub.f32 %v112, %v240
    %v369 = vsub.f32 %v113, %v241
    %v370 = vsub.f32 %v114, %v242
    %v371 = vsub.f32 %v115, %v243
    %v372 = vsub.f32 %v116, %v244
    %v373 = vsub.f32 %v117, %v245
    %v374 = vsub.f32 %v118, %v246
    %v375 = vsub.f32 %v119, %v247
    %v376 = vsub.f32 %v120, %v248
    %v377 = vsub.f32 %v121, %v249
    %v378 = vsub.f32 %v122, %v250
    %v379 = vsub.f32 %v123, %v251
    %v380 = vsub.f32 %v124, %v252
    %v381 = vsub.f32 %v125, %v253
    %v382 = vsub.f32 %v126, %v254
    %v383 = vsub.f32 %v127, %v255
    %v384 = vsub.f32 %v128, %v256
    %v385 = vsub.f32 %v129, %v257
    %v386 = vsub.f32 %v130, %v258
    %v387 = vsub.f32 %v131, %v259
    %v388 = vsub.f32 %v132, %v260
    %v389 = vsub.f32 %v133, %v261
    %v390 = vsub.f32 %v134, %v262
    %v391 = vsub.f32 %v135, %v263
    %v392 = vsub.f32 %v136, %v264
    %v393 = vsub.f32 %v137, %v265
    %v394 = vsub.f32 %v138, %v266
    %v395 = vsub.f32 %v139, %v267
    %v396 = vsub.f32 %v140, %v268
    %v397 = vsub.f32 %v141, %v269
    %v398 = vsub.f32 %v142, %v270
    %v399 = vsub.f32 %v143, %v271
    %v400 = vsub.f32 %v144, %v272
    %v401 = vsub.f32 %v145, %v273
    %v402 = vsub.f32 %v146, %v274
    %v403 = vsub.f32 %v147, %v275
    %v404 = vsub.f32 %v148, %v276
    %v405 = vsub.f32 %v149, %v277
    %v406 = vsub.f32 %v150, %v278
    %v407 = vsub.f32 %v151, %v279
    %v408 = vsub.f32 %v152, %v280
    %v409 = vsub.f32 %v153, %v281
    %v410 = vsub.f32 %v154, %v282
    %v411 = vsub.f32 %v155, %v283
    %v412 = vsub.f32 %v156, %v284
    %v413 = vsub.f32 %v157, %v285
    %v414 = vsub.f32 %v158, %v286
    %v415 = vsub.f32 %v159, %v287
    %v416 = vsub.f32 %v160, %v288
    %v417 = vsub.f32 %v161, %v289
    %v418 = vsub.f32 %v162, %v290
    %v419 = vsub.f32 %v163, %v291
    %v420 = vsub.f32 %v164, %v292
    %v421 = vsub.f32 %v165, %v293
    %v422 = vsub.f32 %v166, %v294
    %v423 = vsub.f32 %v167, %v295
    %v424 = vsub.f32 %v168, %v296
    %v425 = vsub.f32 %v169, %v297
    %v426 = vsub.f32 %v170, %v298
    %v427 = vsub.f32 %v171, %v299
    %v428 = vsub.f32 %v172, %v300
    %v429 = vsub.f32 %v173, %v301
    %v430 = vsub.f32 %v174, %v302
    %v431 = vsub.f32 %v175, %v303
    %v432 = vsub.f32 %v176, %v304
    %v433 = vsub.f32 %v177, %v305
    %v434 = vsub.f32 %v178, %v306
    %v435 = vsub.f32 %v179, %v307
    %v436 = vsub.f32 %v180, %v308
    %v437 = vsub.f32 %v181, %v309
    %v438 = vsub.f32 %v182, %v310
    %v439 = vsub.f32 %v183, %v311
    %v440 = vsub.f32 %v184, %v312
    %v441 = vsub.f32 %v185, %v313
    %v442 = vsub.f32 %v186, %v314
    %v443 = vsub.f32 %v187, %v315
    %v444 = vsub.f32 %v188, %v316
    %v445 = vsub.f32 %v189, %v317
    %v446 = vsub.f32 %v190, %v318
    %v447 = vsub.f32 %v191, %v319
    %v448 = vsub.f32 %v192, %v320
    %v449 = vsub.f32 %v193, %v321
    %v450 = vsub.f32 %v194, %v322
    %v451 = vsub.f32 %v195, %v323
    %v452 = vsub.f32 %v196, %v324
    %v453 = vsub.f32 %v197, %v325
    %v454 = vsub.f32 %v198, %v326
    %v455 = vsub.f32 %v199, %v327
    %v456 = vsub.f32 %v200, %v328
    %v457 = vsub.f32 %v201, %v329
    %v458 = vsub.f32 %v202, %v330
    %v459 = vsub.f32 %v203, %v331
    %v460 = vsub.f32 %v204, %v332
    %v461 = vsub.f32 %v205, %v333
    %v462 = vsub.f32 %v206, %v334
    %v463 = vsub.f32 %v207, %v335
    %v464 = vsub.f32 %v208, %v336
    %v465 = vsub.f32 %v209, %v337
    %v466 = vmul.f32 %v338, %v338
    %v467 = vmul.f32 %v339, %v339
    %v468 = vmul.f32 %v340, %v340
    %v469 = vmul.f32 %v341, %v341
    %v470 = vmul.f32 %v342, %v342
    %v471 = vmul.f32 %v343, %v343
    %v472 = vmul.f32 %v344, %v344
    %v473 = vmul.f32 %v345, %v345
    %v474 = vmul.f32 %v346, %v346
    %v475 = vmul.f32 %v347, %v347
    %v476 = vmul.f32 %v348, %v348
    %v477 = vmul.f32 %v349, %v349
    %v478 = vmul.f32 %v350, %v350
    %v479 = vmul.f32 %v351, %v351
    %v480 = vmul.f32 %v352, %v352
    %v481 = vmul.f32 %v353, %v353
    %v482 = vmul.f32 %v354, %v354
    %v483 = vmul.f32 %v355, %v355
    %v484 = vmul.f32 %v356, %v356
    %v485 = vmul.f32 %v357, %v357
    %v486 = vmul.f32 %v358, %v358
    %v487 = vmul.f32 %v359, %v359
    %v488 = vmul.f32 %v360, %v360
    %v489 = vmul.f32 %v361, %v361
    %v490 = vmul.f32 %v362, %v362
    %v491 = vmul.f32 %v363, %v363
    %v492 = vmul.f32 %v364, %v364
    %v493 = vmul.f32 %v365, %v365
    %v494 = vmul.f32 %v366, %v366
    %v495 = vmul.f32 %v367, %v367
    %v496 = vmul.f32 %v368, %v368
    %v497 = vmul.f32 %v369, %v369
    %v498 = vmul.f32 %v370, %v370
    %v499 = vmul.f32 %v371, %v371
    %v500 = vmul.f32 %v372, %v372
    %v501 = vmul.f32 %v373, %v373
    %v502 = vmul.f32 %v374, %v374
    %v503 = vmul.f32 %v375, %v375
    %v504 = vmul.f32 %v376, %v376
    %v505 = vmul.f32 %v377, %v377
    %v506 = vmul.f32 %v378, %v378
    %v507 = vmul.f32 %v379, %v379
    %v508 = vmul.f32 %v380, %v380
    %v509 = vmul.f32 %v381, %v381
    %v510 = vmul.f32 %v382, %v382
    %v511 = vmul.f32 %v383, %v383
    %v512 = vmul.f32 %v384, %v384
    %v513 = vmul.f32 %v385, %v385
    %v514 = vmul.f32 %v386, %v386
    %v515 = vmul.f32 %v387, %v387
    %v516 = vmul.f32 %v388, %v388
    %v517 = vmul.f32 %v389, %v389
    %v518 = vmul.f32 %v390, %v390
    %v519 = vmul.f32 %v391, %v391
    %v520 = vmul.f32 %v392, %v392
    %v521 = vmul.f32 %v393, %v393
    %v522 = vmul.f32 %v394, %v394
    %v523 = vmul.f32 %v395, %v395
    %v524 = vmul.f32 %v396, %v396
    %v525 = vmul.f32 %v397, %v397
    %v526 = vmul.f32 %v398, %v398
    %v527 = vmul.f32 %v399, %v399
    %v528 = vmul.f32 %v400, %v400
    %v529 = vmul.f32 %v401, %v401
    %v530 = vmul.f32 %v402, %v402
    %v531 = vmul.f32 %v403, %v403
    %v532 = vmul.f32 %v404, %v404
    %v533 = vmul.f32 %v405, %v405
    %v534 = vmul.f32 %v406, %v406
    %v535 = vmul.f32 %v407, %v407
    %v536 = vmul.f32 %v408, %v408
    %v537 = vmul.f32 %v409, %v409
    %v538 = vmul.f32 %v410, %v410
    %v539 = vmul.f32 %v411, %v411
    %v540 = vmul.f32 %v412, %v412
    %v541 = vmul.f32 %v413, %v413
    %v542 = vmul.f32 %v414, %v414
    %v543 = vmul.f32 %v415, %v415
    %v544 = vmul.f32 %v416, %v416
    %v545 = vmul.f32 %v417, %v417
    %v546 = vmul.f32 %v418, %v418
    %v547 = vmul.f32 %v419, %v419
    %v548 = vmul.f32 %v420, %v420
    %v549 = vmul.f32 %v421, %v421
    %v550 = vmul.f32 %v422, %v422
    %v551 = vmul.f32 %v423, %v423
    %v552 = vmul.f32 %v424, %v424
    %v553 = vmul.f32 %v425, %v425
    %v554 = vmul.f32 %v426, %v426
    %v555 = vmul.f32 %v427, %v427
    %v556 = vmul.f32 %v428, %v428
    %v557 = vmul.f32 %v429, %v429
    %v558 = vmul.f32 %v430, %v430
    %v559 = vmul.f32 %v431, %v431
    %v560 = vmul.f32 %v432, %v432
    %v561 = vmul.f32 %v433, %v433
    %v562 = vmul.f32 %v434, %v434
    %v563 = vmul.f32 %v435, %v435
    %v564 = vmul.f32 %v436, %v436
    %v565 = vmul.f32 %v437, %v437
    %v566 = vmul.f32 %v438, %v438
    %v567 = vmul.f32 %v439, %v439
    %v568 = vmul.f32 %v440, %v440
    %v569 = vmul.f32 %v441, %v441
    %v570 = vmul.f32 %v442, %v442
    %v571 = vmul.f32 %v443, %v443
    %v572 = vmul.f32 %v444, %v444
    %v573 = vmul.f32 %v445, %v445
    %v574 = vmul.f32 %v446, %v446
    %v575 = vmul.f32 %v447, %v447
    %v576 = vmul.f32 %v448, %v448
    %v577 = vmul.f32 %v449, %v449
    %v578 = vmul.f32 %v450, %v450
    %v579 = vmul.f32 %v451, %v451
    %v580 = vmul.f32 %v452, %v452
    %v581 = vmul.f32 %v453, %v453
    %v582 = vmul.f32 %v454, %v454
    %v583 = vmul.f32 %v455, %v455
    %v584 = vmul.f32 %v456, %v456
    %v585 = vmul.f32 %v457, %v457
    %v586 = vmul.f32 %v458, %v458
    %v587 = vmul.f32 %v459, %v459
    %v588 = vmul.f32 %v460, %v460
    %v589 = vmul.f32 %v461, %v461
    %v590 = vmul.f32 %v462, %v462
    %v591 = vmul.f32 %v463, %v463
    %v592 = vmul.f32 %v464, %v464
    %v593 = vmul.f32 %v465, %v465
    %v594 = vld [vmem:[#allocation7] sm:$0xff]
    %v595 = vld [vmem:[#allocation7 + $0x8] sm:$0xff]
    %v596 = vld [vmem:[#allocation7 + $0x10] sm:$0xff]
    %v597 = vld [vmem:[#allocation7 + $0x18] sm:$0xff]
    %v598 = vld [vmem:[#allocation7 + $0x20] sm:$0xff]
    %v599 = vld [vmem:[#allocation7 + $0x28] sm:$0xff]
    %v600 = vld [vmem:[#allocation7 + $0x30] sm:$0xff]
    %v601 = vld [vmem:[#allocation7 + $0x38] sm:$0xff]
    %v602 = vld [vmem:[#allocation7 + $0x40] sm:$0xff]
    %v603 = vld [vmem:[#allocation7 + $0x48] sm:$0xff]
    %v604 = vld [vmem:[#allocation7 + $0x50] sm:$0xff]
    %v605 = vld [vmem:[#allocation7 + $0x58] sm:$0xff]
    %v606 = vld [vmem:[#allocation7 + $0x60] sm:$0xff]
    %v607 = vld [vmem:[#allocation7 + $0x68] sm:$0xff]
    %v608 = vld [vmem:[#allocation7 + $0x70] sm:$0xff]
    %v609 = vld [vmem:[#allocation7 + $0x78] sm:$0xff]
    %v610 = vld [vmem:[#allocation7 + $0x80] sm:$0xff]
    %v611 = vld [vmem:[#allocation7 + $0x88] sm:$0xff]
    %v612 = vld [vmem:[#allocation7 + $0x90] sm:$0xff]
    %v613 = vld [vmem:[#allocation7 + $0x98] sm:$0xff]
    %v614 = vld [vmem:[#allocation7 + $0xa0] sm:$0xff]
    %v615 = vld [vmem:[#allocation7 + $0xa8] sm:$0xff]
    %v616 = vld [vmem:[#allocation7 + $0xb0] sm:$0xff]
    %v617 = vld [vmem:[#allocation7 + $0xb8] sm:$0xff]
    %v618 = vld [vmem:[#allocation7 + $0xc0] sm:$0xff]
    %v619 = vld [vmem:[#allocation7 + $0xc8] sm:$0xff]
    %v620 = vld [vmem:[#allocation7 + $0xd0] sm:$0xff]
    %v621 = vld [vmem:[#allocation7 + $0xd8] sm:$0xff]
    %v622 = vld [vmem:[#allocation7 + $0xe0] sm:$0xff]
    %v623 = vld [vmem:[#allocation7 + $0xe8] sm:$0xff]
    %v624 = vld [vmem:[#allocation7 + $0xf0] sm:$0xff]
    %v625 = vld [vmem:[#allocation7 + $0xf8] sm:$0xff]
    %v626 = vld [vmem:[#allocation7 + $0x100] sm:$0xff]
    %v627 = vld [vmem:[#allocation7 + $0x108] sm:$0xff]
    %v628 = vld [vmem:[#allocation7 + $0x110] sm:$0xff]
    %v629 = vld [vmem:[#allocation7 + $0x118] sm:$0xff]
    %v630 = vld [vmem:[#allocation7 + $0x120] sm:$0xff]
    %v631 = vld [vmem:[#allocation7 + $0x128] sm:$0xff]
    %v632 = vld [vmem:[#allocation7 + $0x130] sm:$0xff]
    %v633 = vld [vmem:[#allocation7 + $0x138] sm:$0xff]
    %v634 = vld [vmem:[#allocation7 + $0x140] sm:$0xff]
    %v635 = vld [vmem:[#allocation7 + $0x148] sm:$0xff]
    %v636 = vld [vmem:[#allocation7 + $0x150] sm:$0xff]
    %v637 = vld [vmem:[#allocation7 + $0x158] sm:$0xff]
    %v638 = vld [vmem:[#allocation7 + $0x160] sm:$0xff]
    %v639 = vld [vmem:[#allocation7 + $0x168] sm:$0xff]
    %v640 = vld [vmem:[#allocation7 + $0x170] sm:$0xff]
    %v641 = vld [vmem:[#allocation7 + $0x178] sm:$0xff]
    %v642 = vld [vmem:[#allocation7 + $0x180] sm:$0xff]
    %v643 = vld [vmem:[#allocation7 + $0x188] sm:$0xff]
    %v644 = vld [vmem:[#allocation7 + $0x190] sm:$0xff]
    %v645 = vld [vmem:[#allocation7 + $0x198] sm:$0xff]
    %v646 = vld [vmem:[#allocation7 + $0x1a0] sm:$0xff]
    %v647 = vld [vmem:[#allocation7 + $0x1a8] sm:$0xff]
    %v648 = vld [vmem:[#allocation7 + $0x1b0] sm:$0xff]
    %v649 = vld [vmem:[#allocation7 + $0x1b8] sm:$0xff]
    %v650 = vld [vmem:[#allocation7 + $0x1c0] sm:$0xff]
    %v651 = vld [vmem:[#allocation7 + $0x1c8] sm:$0xff]
    %v652 = vld [vmem:[#allocation7 + $0x1d0] sm:$0xff]
    %v653 = vld [vmem:[#allocation7 + $0x1d8] sm:$0xff]
    %v654 = vld [vmem:[#allocation7 + $0x1e0] sm:$0xff]
    %v655 = vld [vmem:[#allocation7 + $0x1e8] sm:$0xff]
    %v656 = vld [vmem:[#allocation7 + $0x1f0] sm:$0xff]
    %v657 = vld [vmem:[#allocation7 + $0x1f8] sm:$0xff]
    %v658 = vld [vmem:[#allocation7 + $0x200] sm:$0xff]
    %v659 = vld [vmem:[#allocation7 + $0x208] sm:$0xff]
    %v660 = vld [vmem:[#allocation7 + $0x210] sm:$0xff]
    %v661 = vld [vmem:[#allocation7 + $0x218] sm:$0xff]
    %v662 = vld [vmem:[#allocation7 + $0x220] sm:$0xff]
    %v663 = vld [vmem:[#allocation7 + $0x228] sm:$0xff]
    %v664 = vld [vmem:[#allocation7 + $0x230] sm:$0xff]
    %v665 = vld [vmem:[#allocation7 + $0x238] sm:$0xff]
    %v666 = vld [vmem:[#allocation7 + $0x240] sm:$0xff]
    %v667 = vld [vmem:[#allocation7 + $0x248] sm:$0xff]
    %v668 = vld [vmem:[#allocation7 + $0x250] sm:$0xff]
    %v669 = vld [vmem:[#allocation7 + $0x258] sm:$0xff]
    %v670 = vld [vmem:[#allocation7 + $0x260] sm:$0xff]
    %v671 = vld [vmem:[#allocation7 + $0x268] sm:$0xff]
    %v672 = vld [vmem:[#allocation7 + $0x270] sm:$0xff]
    %v673 = vld [vmem:[#allocation7 + $0x278] sm:$0xff]
    %v674 = vld [vmem:[#allocation7 + $0x280] sm:$0xff]
    %v675 = vld [vmem:[#allocation7 + $0x288] sm:$0xff]
    %v676 = vld [vmem:[#allocation7 + $0x290] sm:$0xff]
    %v677 = vld [vmem:[#allocation7 + $0x298] sm:$0xff]
    %v678 = vld [vmem:[#allocation7 + $0x2a0] sm:$0xff]
    %v679 = vld [vmem:[#allocation7 + $0x2a8] sm:$0xff]
    %v680 = vld [vmem:[#allocation7 + $0x2b0] sm:$0xff]
    %v681 = vld [vmem:[#allocation7 + $0x2b8] sm:$0xff]
    %v682 = vld [vmem:[#allocation7 + $0x2c0] sm:$0xff]
    %v683 = vld [vmem:[#allocation7 + $0x2c8] sm:$0xff]
    %v684 = vld [vmem:[#allocation7 + $0x2d0] sm:$0xff]
    %v685 = vld [vmem:[#allocation7 + $0x2d8] sm:$0xff]
    %v686 = vld [vmem:[#allocation7 + $0x2e0] sm:$0xff]
    %v687 = vld [vmem:[#allocation7 + $0x2e8] sm:$0xff]
    %v688 = vld [vmem:[#allocation7 + $0x2f0] sm:$0xff]
    %v689 = vld [vmem:[#allocation7 + $0x2f8] sm:$0xff]
    %v690 = vld [vmem:[#allocation7 + $0x300] sm:$0xff]
    %v691 = vld [vmem:[#allocation7 + $0x308] sm:$0xff]
    %v692 = vld [vmem:[#allocation7 + $0x310] sm:$0xff]
    %v693 = vld [vmem:[#allocation7 + $0x318] sm:$0xff]
    %v694 = vld [vmem:[#allocation7 + $0x320] sm:$0xff]
    %v695 = vld [vmem:[#allocation7 + $0x328] sm:$0xff]
    %v696 = vld [vmem:[#allocation7 + $0x330] sm:$0xff]
    %v697 = vld [vmem:[#allocation7 + $0x338] sm:$0xff]
    %v698 = vld [vmem:[#allocation7 + $0x340] sm:$0xff]
    %v699 = vld [vmem:[#allocation7 + $0x348] sm:$0xff]
    %v700 = vld [vmem:[#allocation7 + $0x350] sm:$0xff]
    %v701 = vld [vmem:[#allocation7 + $0x358] sm:$0xff]
    %v702 = vld [vmem:[#allocation7 + $0x360] sm:$0xff]
    %v703 = vld [vmem:[#allocation7 + $0x368] sm:$0xff]
    %v704 = vld [vmem:[#allocation7 + $0x370] sm:$0xff]
    %v705 = vld [vmem:[#allocation7 + $0x378] sm:$0xff]
    %v706 = vld [vmem:[#allocation7 + $0x380] sm:$0xff]
    %v707 = vld [vmem:[#allocation7 + $0x388] sm:$0xff]
    %v708 = vld [vmem:[#allocation7 + $0x390] sm:$0xff]
    %v709 = vld [vmem:[#allocation7 + $0x398] sm:$0xff]
    %v710 = vld [vmem:[#allocation7 + $0x3a0] sm:$0xff]
    %v711 = vld [vmem:[#allocation7 + $0x3a8] sm:$0xff]
    %v712 = vld [vmem:[#allocation7 + $0x3b0] sm:$0xff]
    %v713 = vld [vmem:[#allocation7 + $0x3b8] sm:$0xff]
    %v714 = vld [vmem:[#allocation7 + $0x3c0] sm:$0xff]
    %v715 = vld [vmem:[#allocation7 + $0x3c8] sm:$0xff]
    %v716 = vld [vmem:[#allocation7 + $0x3d0] sm:$0xff]
    %v717 = vld [vmem:[#allocation7 + $0x3d8] sm:$0xff]
    %v718 = vld [vmem:[#allocation7 + $0x3e0] sm:$0xff]
    %v719 = vld [vmem:[#allocation7 + $0x3e8] sm:$0xff]
    %v720 = vld [vmem:[#allocation7 + $0x3f0] sm:$0xff]
    %v721 = vld [vmem:[#allocation7 + $0x3f8] sm:$0xff]
    %v722 = vmul.f32 %v466, %v594
    %v723 = vmul.f32 %v467, %v595
    %v724 = vmul.f32 %v468, %v596
    %v725 = vmul.f32 %v469, %v597
    %v726 = vmul.f32 %v470, %v598
    %v727 = vmul.f32 %v471, %v599
    %v728 = vmul.f32 %v472, %v600
    %v729 = vmul.f32 %v473, %v601
    %v730 = vmul.f32 %v474, %v602
    %v731 = vmul.f32 %v475, %v603
    %v732 = vmul.f32 %v476, %v604
    %v733 = vmul.f32 %v477, %v605
    %v734 = vmul.f32 %v478, %v606
    %v735 = vmul.f32 %v479, %v607
    %v736 = vmul.f32 %v480, %v608
    %v737 = vmul.f32 %v481, %v609
    %v738 = vmul.f32 %v482, %v610
    %v739 = vmul.f32 %v483, %v611
    %v740 = vmul.f32 %v484, %v612
    %v741 = vmul.f32 %v485, %v613
    %v742 = vmul.f32 %v486, %v614
    %v743 = vmul.f32 %v487, %v615
    %v744 = vmul.f32 %v488, %v616
    %v745 = vmul.f32 %v489, %v617
    %v746 = vmul.f32 %v490, %v618
    %v747 = vmul.f32 %v491, %v619
    %v748 = vmul.f32 %v492, %v620
    %v749 = vmul.f32 %v493, %v621
    %v750 = vmul.f32 %v494, %v622
    %v751 = vmul.f32 %v495, %v623
    %v752 = vmul.f32 %v496, %v624
    %v753 = vmul.f32 %v497, %v625
    %v754 = vmul.f32 %v498, %v626
    %v755 = vmul.f32 %v499, %v627
    %v756 = vmul.f32 %v500, %v628
    %v757 = vmul.f32 %v501, %v629
    %v758 = vmul.f32 %v502, %v630
    %v759 = vmul.f32 %v503, %v631
    %v760 = vmul.f32 %v504, %v632
    %v761 = vmul.f32 %v505, %v633
    %v762 = vmul.f32 %v506, %v634
    %v763 = vmul.f32 %v507, %v635
    %v764 = vmul.f32 %v508, %v636
    %v765 = vmul.f32 %v509, %v637
    %v766 = vmul.f32 %v510, %v638
    %v767 = vmul.f32 %v511, %v639
    %v768 = vmul.f32 %v512, %v640
    %v769 = vmul.f32 %v513, %v641
    %v770 = vmul.f32 %v514, %v642
    %v771 = vmul.f32 %v515, %v643
    %v772 = vmul.f32 %v516, %v644
    %v773 = vmul.f32 %v517, %v645
    %v774 = vmul.f32 %v518, %v646
    %v775 = vmul.f32 %v519, %v647
    %v776 = vmul.f32 %v520, %v648
    %v777 = vmul.f32 %v521, %v649
    %v778 = vmul.f32 %v522, %v650
    %v779 = vmul.f32 %v523, %v651
    %v780 = vmul.f32 %v524, %v652
    %v781 = vmul.f32 %v525, %v653
    %v782 = vmul.f32 %v526, %v654
    %v783 = vmul.f32 %v527, %v655
    %v784 = vmul.f32 %v528, %v656
    %v785 = vmul.f32 %v529, %v657
    %v786 = vmul.f32 %v530, %v658
    %v787 = vmul.f32 %v531, %v659
    %v788 = vmul.f32 %v532, %v660
    %v789 = vmul.f32 %v533, %v661
    %v790 = vmul.f32 %v534, %v662
    %v791 = vmul.f32 %v535, %v663
    %v792 = vmul.f32 %v536, %v664
    %v793 = vmul.f32 %v537, %v665
    %v794 = vmul.f32 %v538, %v666
    %v795 = vmul.f32 %v539, %v667
    %v796 = vmul.f32 %v540, %v668
    %v797 = vmul.f32 %v541, %v669
    %v798 = vmul.f32 %v542, %v670
    %v799 = vmul.f32 %v543, %v671
    %v800 = vmul.f32 %v544, %v672
    %v801 = vmul.f32 %v545, %v673
    %v802 = vmul.f32 %v546, %v674
    %v803 = vmul.f32 %v547, %v675
    %v804 = vmul.f32 %v548, %v676
    %v805 = vmul.f32 %v549, %v677
    %v806 = vmul.f32 %v550, %v678
    %v807 = vmul.f32 %v551, %v679
    %v808 = vmul.f32 %v552, %v680
    %v809 = vmul.f32 %v553, %v681
    %v810 = vmul.f32 %v554, %v682
    %v811 = vmul.f32 %v555, %v683
    %v812 = vmul.f32 %v556, %v684
    %v813 = vmul.f32 %v557, %v685
    %v814 = vmul.f32 %v558, %v686
    %v815 = vmul.f32 %v559, %v687
    %v816 = vmul.f32 %v560, %v688
    %v817 = vmul.f32 %v561, %v689
    %v818 = vmul.f32 %v562, %v690
    %v819 = vmul.f32 %v563, %v691
    %v820 = vmul.f32 %v564, %v692
    %v821 = vmul.f32 %v565, %v693
    %v822 = vmul.f32 %v566, %v694
    %v823 = vmul.f32 %v567, %v695
    %v824 = vmul.f32 %v568, %v696
    %v825 = vmul.f32 %v569, %v697
    %v826 = vmul.f32 %v570, %v698
    %v827 = vmul.f32 %v571, %v699
    %v828 = vmul.f32 %v572, %v700
    %v829 = vmul.f32 %v573, %v701
    %v830 = vmul.f32 %v574, %v702
    %v831 = vmul.f32 %v575, %v703
    %v832 = vmul.f32 %v576, %v704
    %v833 = vmul.f32 %v577, %v705
    %v834 = vmul.f32 %v578, %v706
    %v835 = vmul.f32 %v579, %v707
    %v836 = vmul.f32 %v580, %v708
    %v837 = vmul.f32 %v581, %v709
    %v838 = vmul.f32 %v582, %v710
    %v839 = vmul.f32 %v583, %v711
    %v840 = vmul.f32 %v584, %v712
    %v841 = vmul.f32 %v585, %v713
    %v842 = vmul.f32 %v586, %v714
    %v843 = vmul.f32 %v587, %v715
    %v844 = vmul.f32 %v588, %v716
    %v845 = vmul.f32 %v589, %v717
    %v846 = vmul.f32 %v590, %v718
    %v847 = vmul.f32 %v591, %v719
    %v848 = vmul.f32 %v592, %v720
    %v849 = vmul.f32 %v593, %v721
    %s850 = sadd.s32 0, 0
    %s851 = smul.u32 %s850, 1024
    %s852 = sadd.s32 %s851, 1024
    %p853 = scmp.gt.s32.totalorder %s852, 1024
    // Predicated region
    $region30: #{tpu_custom_call.1} parent=1 // pred_check
      %p854 = pneg %p853
    $region31: #{tpu_custom_call.1} parent=1 // pred_check_branch
      %856 = sbr.rel (%p854) target = $region33
    $region32: #{tpu_custom_call.1} parent=1 // pred_region
      %v857 = vlaneseq
      %v858 = vshrl.u32 %v857, 7
      %v859 = vadd.s32 %v858, 8
      %v860 = vadd.s32 %v858, 16
      %v861 = vadd.s32 %v858, 24
      %v862 = vadd.s32 %v858, 32
      %v863 = vadd.s32 %v858, 40
      %v864 = vadd.s32 %v858, 48
      %v865 = vadd.s32 %v858, 56
      %v866 = vadd.s32 %v858, 64
      %v867 = vadd.s32 %v858, 72
      %v868 = vadd.s32 %v858, 80
      %v869 = vadd.s32 %v858, 88
      %v870 = vadd.s32 %v858, 96
      %v871 = vadd.s32 %v858, 104
      %v872 = vadd.s32 %v858, 112
      %v873 = vadd.s32 %v858, 120
      %v874 = vadd.s32 %v858, 128
      %v875 = vadd.s32 %v858, 136
      %v876 = vadd.s32 %v858, 144
      %v877 = vadd.s32 %v858, 152
      %v878 = vadd.s32 %v858, 160
      %v879 = vadd.s32 %v858, 168
      %v880 = vadd.s32 %v858, 176
      %v881 = vadd.s32 %v858, 184
      %v882 = vadd.s32 %v858, 192
      %v883 = vadd.s32 %v858, 200
      %v884 = vadd.s32 %v858, 208
      %v885 = vadd.s32 %v858, 216
      %v886 = vadd.s32 %v858, 224
      %v887 = vadd.s32 %v858, 232
      %v888 = vadd.s32 %v858, 240
      %v889 = vadd.s32 %v858, 248
      %v890 = vadd.s32 %v858, 256
      %v891 = vadd.s32 %v858, 264
      %v892 = vadd.s32 %v858, 272
      %v893 = vadd.s32 %v858, 280
      %v894 = vadd.s32 %v858, 288
      %v895 = vadd.s32 %v858, 296
      %v896 = vadd.s32 %v858, 304
      %v897 = vadd.s32 %v858, 312
      %v898 = vadd.s32 %v858, 320
      %v899 = vadd.s32 %v858, 328
      %v900 = vadd.s32 %v858, 336
      %v901 = vadd.s32 %v858, 344
      %v902 = vadd.s32 %v858, 352
      %v903 = vadd.s32 %v858, 360
      %v904 = vadd.s32 %v858, 368
      %v905 = vadd.s32 %v858, 376
      %v906 = vadd.s32 %v858, 384
      %v907 = vadd.s32 %v858, 392
      %v908 = vadd.s32 %v858, 400
      %v909 = vadd.s32 %v858, 408
      %v910 = vadd.s32 %v858, 416
      %v911 = vadd.s32 %v858, 424
      %v912 = vadd.s32 %v858, 432
      %v913 = vadd.s32 %v858, 440
      %v914 = vadd.s32 %v858, 448
      %v915 = vadd.s32 %v858, 456
      %v916 = vadd.s32 %v858, 464
      %v917 = vadd.s32 %v858, 472
      %v918 = vadd.s32 %v858, 480
      %v919 = vadd.s32 %v858, 488
      %v920 = vadd.s32 %v858, 496
      %v921 = vadd.s32 %v858, 504
      %v922 = vadd.s32 %v858, 512
      %v923 = vadd.s32 %v858, 520
      %v924 = vadd.s32 %v858, 528
      %v925 = vadd.s32 %v858, 536
      %v926 = vadd.s32 %v858, 544
      %v927 = vadd.s32 %v858, 552
      %v928 = vadd.s32 %v858, 560
      %v929 = vadd.s32 %v858, 568
      %v930 = vadd.s32 %v858, 576
      %v931 = vadd.s32 %v858, 584
      %v932 = vadd.s32 %v858, 592
      %v933 = vadd.s32 %v858, 600
      %v934 = vadd.s32 %v858, 608
      %v935 = vadd.s32 %v858, 616
      %v936 = vadd.s32 %v858, 624
      %v937 = vadd.s32 %v858, 632
      %v938 = vadd.s32 %v858, 640
      %v939 = vadd.s32 %v858, 648
      %v940 = vadd.s32 %v858, 656
      %v941 = vadd.s32 %v858, 664
      %v942 = vadd.s32 %v858, 672
      %v943 = vadd.s32 %v858, 680
      %v944 = vadd.s32 %v858, 688
      %v945 = vadd.s32 %v858, 696
      %v946 = vadd.s32 %v858, 704
      %v947 = vadd.s32 %v858, 712
      %v948 = vadd.s32 %v858, 720
      %v949 = vadd.s32 %v858, 728
      %v950 = vadd.s32 %v858, 736
      %v951 = vadd.s32 %v858, 744
      %v952 = vadd.s32 %v858, 752
      %v953 = vadd.s32 %v858, 760
      %v954 = vadd.s32 %v858, 768
      %v955 = vadd.s32 %v858, 776
      %v956 = vadd.s32 %v858, 784
      %v957 = vadd.s32 %v858, 792
      %v958 = vadd.s32 %v858, 800
      %v959 = vadd.s32 %v858, 808
      %v960 = vadd.s32 %v858, 816
      %v961 = vadd.s32 %v858, 824
      %v962 = vadd.s32 %v858, 832
      %v963 = vadd.s32 %v858, 840
      %v964 = vadd.s32 %v858, 848
      %v965 = vadd.s32 %v858, 856
      %v966 = vadd.s32 %v858, 864
      %v967 = vadd.s32 %v858, 872
      %v968 = vadd.s32 %v858, 880
      %v969 = vadd.s32 %v858, 888
      %v970 = vadd.s32 %v858, 896
      %v971 = vadd.s32 %v858, 904
      %v972 = vadd.s32 %v858, 912
      %v973 = vadd.s32 %v858, 920
      %v974 = vadd.s32 %v858, 928
      %v975 = vadd.s32 %v858, 936
      %v976 = vadd.s32 %v858, 944
      %v977 = vadd.s32 %v858, 952
      %v978 = vadd.s32 %v858, 960
      %v979 = vadd.s32 %v858, 968
      %v980 = vadd.s32 %v858, 976
      %v981 = vadd.s32 %v858, 984
      %v982 = vadd.s32 %v858, 992
      %v983 = vadd.s32 %v858, 1000
      %v984 = vadd.s32 %v858, 1008
      %v985 = vadd.s32 %v858, 1016
      %v986 = vstv %s851
      %v987 = vadd.s32 %v986, %v858
      %v988 = vadd.s32 %v986, %v859
      %v989 = vadd.s32 %v986, %v860
      %v990 = vadd.s32 %v986, %v861
      %v991 = vadd.s32 %v986, %v862
      %v992 = vadd.s32 %v986, %v863
      %v993 = vadd.s32 %v986, %v864
      %v994 = vadd.s32 %v986, %v865
      %v995 = vadd.s32 %v986, %v866
      %v996 = vadd.s32 %v986, %v867
      %v997 = vadd.s32 %v986, %v868
      %v998 = vadd.s32 %v986, %v869
      %v999 = vadd.s32 %v986, %v870
      %v1000 = vadd.s32 %v986, %v871
      %v1001 = vadd.s32 %v986, %v872
      %v1002 = vadd.s32 %v986, %v873
      %v1003 = vadd.s32 %v986, %v874
      %v1004 = vadd.s32 %v986, %v875
      %v1005 = vadd.s32 %v986, %v876
      %v1006 = vadd.s32 %v986, %v877
      %v1007 = vadd.s32 %v986, %v878
      %v1008 = vadd.s32 %v986, %v879
      %v1009 = vadd.s32 %v986, %v880
      %v1010 = vadd.s32 %v986, %v881
      %v1011 = vadd.s32 %v986, %v882
      %v1012 = vadd.s32 %v986, %v883
      %v1013 = vadd.s32 %v986, %v884
      %v1014 = vadd.s32 %v986, %v885
      %v1015 = vadd.s32 %v986, %v886
      %v1016 = vadd.s32 %v986, %v887
      %v1017 = vadd.s32 %v986, %v888
      %v1018 = vadd.s32 %v986, %v889
      %v1019 = vadd.s32 %v986, %v890
      %v1020 = vadd.s32 %v986, %v891
      %v1021 = vadd.s32 %v986, %v892
      %v1022 = vadd.s32 %v986, %v893
      %v1023 = vadd.s32 %v986, %v894
      %v1024 = vadd.s32 %v986, %v895
      %v1025 = vadd.s32 %v986, %v896
      %v1026 = vadd.s32 %v986, %v897
      %v1027 = vadd.s32 %v986, %v898
      %v1028 = vadd.s32 %v986, %v899
      %v1029 = vadd.s32 %v986, %v900
      %v1030 = vadd.s32 %v986, %v901
      %v1031 = vadd.s32 %v986, %v902
      %v1032 = vadd.s32 %v986, %v903
      %v1033 = vadd.s32 %v986, %v904
      %v1034 = vadd.s32 %v986, %v905
      %v1035 = vadd.s32 %v986, %v906
      %v1036 = vadd.s32 %v986, %v907
      %v1037 = vadd.s32 %v986, %v908
      %v1038 = vadd.s32 %v986, %v909
      %v1039 = vadd.s32 %v986, %v910
      %v1040 = vadd.s32 %v986, %v911
      %v1041 = vadd.s32 %v986, %v912
      %v1042 = vadd.s32 %v986, %v913
      %v1043 = vadd.s32 %v986, %v914
      %v1044 = vadd.s32 %v986, %v915
      %v1045 = vadd.s32 %v986, %v916
      %v1046 = vadd.s32 %v986, %v917
      %v1047 = vadd.s32 %v986, %v918
      %v1048 = vadd.s32 %v986, %v919
      %v1049 = vadd.s32 %v986, %v920
      %v1050 = vadd.s32 %v986, %v921
      %v1051 = vadd.s32 %v986, %v922
      %v1052 = vadd.s32 %v986, %v923
      %v1053 = vadd.s32 %v986, %v924
      %v1054 = vadd.s32 %v986, %v925
      %v1055 = vadd.s32 %v986, %v926
      %v1056 = vadd.s32 %v986, %v927
      %v1057 = vadd.s32 %v986, %v928
      %v1058 = vadd.s32 %v986, %v929
      %v1059 = vadd.s32 %v986, %v930
      %v1060 = vadd.s32 %v986, %v931
      %v1061 = vadd.s32 %v986, %v932
      %v1062 = vadd.s32 %v986, %v933
      %v1063 = vadd.s32 %v986, %v934
      %v1064 = vadd.s32 %v986, %v935
      %v1065 = vadd.s32 %v986, %v936
      %v1066 = vadd.s32 %v986, %v937
      %v1067 = vadd.s32 %v986, %v938
      %v1068 = vadd.s32 %v986, %v939
      %v1069 = vadd.s32 %v986, %v940
      %v1070 = vadd.s32 %v986, %v941
      %v1071 = vadd.s32 %v986, %v942
      %v1072 = vadd.s32 %v986, %v943
      %v1073 = vadd.s32 %v986, %v944
      %v1074 = vadd.s32 %v986, %v945
      %v1075 = vadd.s32 %v986, %v946
      %v1076 = vadd.s32 %v986, %v947
      %v1077 = vadd.s32 %v986, %v948
      %v1078 = vadd.s32 %v986, %v949
      %v1079 = vadd.s32 %v986, %v950
      %v1080 = vadd.s32 %v986, %v951
      %v1081 = vadd.s32 %v986, %v952
      %v1082 = vadd.s32 %v986, %v953
      %v1083 = vadd.s32 %v986, %v954
      %v1084 = vadd.s32 %v986, %v955
      %v1085 = vadd.s32 %v986, %v956
      %v1086 = vadd.s32 %v986, %v957
      %v1087 = vadd.s32 %v986, %v958
      %v1088 = vadd.s32 %v986, %v959
      %v1089 = vadd.s32 %v986, %v960
      %v1090 = vadd.s32 %v986, %v961
      %v1091 = vadd.s32 %v986, %v962
      %v1092 = vadd.s32 %v986, %v963
      %v1093 = vadd.s32 %v986, %v964
      %v1094 = vadd.s32 %v986, %v965
      %v1095 = vadd.s32 %v986, %v966
      %v1096 = vadd.s32 %v986, %v967
      %v1097 = vadd.s32 %v986, %v968
      %v1098 = vadd.s32 %v986, %v969
      %v1099 = vadd.s32 %v986, %v970
      %v1100 = vadd.s32 %v986, %v971
      %v1101 = vadd.s32 %v986, %v972
      %v1102 = vadd.s32 %v986, %v973
      %v1103 = vadd.s32 %v986, %v974
      %v1104 = vadd.s32 %v986, %v975
      %v1105 = vadd.s32 %v986, %v976
      %v1106 = vadd.s32 %v986, %v977
      %v1107 = vadd.s32 %v986, %v978
      %v1108 = vadd.s32 %v986, %v979
      %v1109 = vadd.s32 %v986, %v980
      %v1110 = vadd.s32 %v986, %v981
      %v1111 = vadd.s32 %v986, %v982
      %v1112 = vadd.s32 %v986, %v983
      %v1113 = vadd.s32 %v986, %v984
      %v1114 = vadd.s32 %v986, %v985
      %vm1115 = vcmp.lt.s32.totalorder %v987, 1024
      %vm1116 = vcmp.lt.s32.totalorder %v988, 1024
      %vm1117 = vcmp.lt.s32.totalorder %v989, 1024
      %vm1118 = vcmp.lt.s32.totalorder %v990, 1024
      %vm1119 = vcmp.lt.s32.totalorder %v991, 1024
      %vm1120 = vcmp.lt.s32.totalorder %v992, 1024
      %vm1121 = vcmp.lt.s32.totalorder %v993, 1024
      %vm1122 = vcmp.lt.s32.totalorder %v994, 1024
      %vm1123 = vcmp.lt.s32.totalorder %v995, 1024
      %vm1124 = vcmp.lt.s32.totalorder %v996, 1024
      %vm1125 = vcmp.lt.s32.totalorder %v997, 1024
      %vm1126 = vcmp.lt.s32.totalorder %v998, 1024
      %vm1127 = vcmp.lt.s32.totalorder %v999, 1024
      %vm1128 = vcmp.lt.s32.totalorder %v1000, 1024
      %vm1129 = vcmp.lt.s32.totalorder %v1001, 1024
      %vm1130 = vcmp.lt.s32.totalorder %v1002, 1024
      %vm1131 = vcmp.lt.s32.totalorder %v1003, 1024
      %vm1132 = vcmp.lt.s32.totalorder %v1004, 1024
      %vm1133 = vcmp.lt.s32.totalorder %v1005, 1024
      %vm1134 = vcmp.lt.s32.totalorder %v1006, 1024
      %vm1135 = vcmp.lt.s32.totalorder %v1007, 1024
      %vm1136 = vcmp.lt.s32.totalorder %v1008, 1024
      %vm1137 = vcmp.lt.s32.totalorder %v1009, 1024
      %vm1138 = vcmp.lt.s32.totalorder %v1010, 1024
      %vm1139 = vcmp.lt.s32.totalorder %v1011, 1024
      %vm1140 = vcmp.lt.s32.totalorder %v1012, 1024
      %vm1141 = vcmp.lt.s32.totalorder %v1013, 1024
      %vm1142 = vcmp.lt.s32.totalorder %v1014, 1024
      %vm1143 = vcmp.lt.s32.totalorder %v1015, 1024
      %vm1144 = vcmp.lt.s32.totalorder %v1016, 1024
      %vm1145 = vcmp.lt.s32.totalorder %v1017, 1024
      %vm1146 = vcmp.lt.s32.totalorder %v1018, 1024
      %vm1147 = vcmp.lt.s32.totalorder %v1019, 1024
      %vm1148 = vcmp.lt.s32.totalorder %v1020, 1024
      %vm1149 = vcmp.lt.s32.totalorder %v1021, 1024
      %vm1150 = vcmp.lt.s32.totalorder %v1022, 1024
      %vm1151 = vcmp.lt.s32.totalorder %v1023, 1024
      %vm1152 = vcmp.lt.s32.totalorder %v1024, 1024
      %vm1153 = vcmp.lt.s32.totalorder %v1025, 1024
      %vm1154 = vcmp.lt.s32.totalorder %v1026, 1024
      %vm1155 = vcmp.lt.s32.totalorder %v1027, 1024
      %vm1156 = vcmp.lt.s32.totalorder %v1028, 1024
      %vm1157 = vcmp.lt.s32.totalorder %v1029, 1024
      %vm1158 = vcmp.lt.s32.totalorder %v1030, 1024
      %vm1159 = vcmp.lt.s32.totalorder %v1031, 1024
      %vm1160 = vcmp.lt.s32.totalorder %v1032, 1024
      %vm1161 = vcmp.lt.s32.totalorder %v1033, 1024
      %vm1162 = vcmp.lt.s32.totalorder %v1034, 1024
      %vm1163 = vcmp.lt.s32.totalorder %v1035, 1024
      %vm1164 = vcmp.lt.s32.totalorder %v1036, 1024
      %vm1165 = vcmp.lt.s32.totalorder %v1037, 1024
      %vm1166 = vcmp.lt.s32.totalorder %v1038, 1024
      %vm1167 = vcmp.lt.s32.totalorder %v1039, 1024
      %vm1168 = vcmp.lt.s32.totalorder %v1040, 1024
      %vm1169 = vcmp.lt.s32.totalorder %v1041, 1024
      %vm1170 = vcmp.lt.s32.totalorder %v1042, 1024
      %vm1171 = vcmp.lt.s32.totalorder %v1043, 1024
      %vm1172 = vcmp.lt.s32.totalorder %v1044, 1024
      %vm1173 = vcmp.lt.s32.totalorder %v1045, 1024
      %vm1174 = vcmp.lt.s32.totalorder %v1046, 1024
      %vm1175 = vcmp.lt.s32.totalorder %v1047, 1024
      %vm1176 = vcmp.lt.s32.totalorder %v1048, 1024
      %vm1177 = vcmp.lt.s32.totalorder %v1049, 1024
      %vm1178 = vcmp.lt.s32.totalorder %v1050, 1024
      %vm1179 = vcmp.lt.s32.totalorder %v1051, 1024
      %vm1180 = vcmp.lt.s32.totalorder %v1052, 1024
      %vm1181 = vcmp.lt.s32.totalorder %v1053, 1024
      %vm1182 = vcmp.lt.s32.totalorder %v1054, 1024
      %vm1183 = vcmp.lt.s32.totalorder %v1055, 1024
      %vm1184 = vcmp.lt.s32.totalorder %v1056, 1024
      %vm1185 = vcmp.lt.s32.totalorder %v1057, 1024
      %vm1186 = vcmp.lt.s32.totalorder %v1058, 1024
      %vm1187 = vcmp.lt.s32.totalorder %v1059, 1024
      %vm1188 = vcmp.lt.s32.totalorder %v1060, 1024
      %vm1189 = vcmp.lt.s32.totalorder %v1061, 1024
      %vm1190 = vcmp.lt.s32.totalorder %v1062, 1024
      %vm1191 = vcmp.lt.s32.totalorder %v1063, 1024
      %vm1192 = vcmp.lt.s32.totalorder %v1064, 1024
      %vm1193 = vcmp.lt.s32.totalorder %v1065, 1024
      %vm1194 = vcmp.lt.s32.totalorder %v1066, 1024
      %vm1195 = vcmp.lt.s32.totalorder %v1067, 1024
      %vm1196 = vcmp.lt.s32.totalorder %v1068, 1024
      %vm1197 = vcmp.lt.s32.totalorder %v1069, 1024
      %vm1198 = vcmp.lt.s32.totalorder %v1070, 1024
      %vm1199 = vcmp.lt.s32.totalorder %v1071, 1024
      %vm1200 = vcmp.lt.s32.totalorder %v1072, 1024
      %vm1201 = vcmp.lt.s32.totalorder %v1073, 1024
      %vm1202 = vcmp.lt.s32.totalorder %v1074, 1024
      %vm1203 = vcmp.lt.s32.totalorder %v1075, 1024
      %vm1204 = vcmp.lt.s32.totalorder %v1076, 1024
      %vm1205 = vcmp.lt.s32.totalorder %v1077, 1024
      %vm1206 = vcmp.lt.s32.totalorder %v1078, 1024
      %vm1207 = vcmp.lt.s32.totalorder %v1079, 1024
      %vm1208 = vcmp.lt.s32.totalorder %v1080, 1024
      %vm1209 = vcmp.lt.s32.totalorder %v1081, 1024
      %vm1210 = vcmp.lt.s32.totalorder %v1082, 1024
      %vm1211 = vcmp.lt.s32.totalorder %v1083, 1024
      %vm1212 = vcmp.lt.s32.totalorder %v1084, 1024
      %vm1213 = vcmp.lt.s32.totalorder %v1085, 1024
      %vm1214 = vcmp.lt.s32.totalorder %v1086, 1024
      %vm1215 = vcmp.lt.s32.totalorder %v1087, 1024
      %vm1216 = vcmp.lt.s32.totalorder %v1088, 1024
      %vm1217 = vcmp.lt.s32.totalorder %v1089, 1024
      %vm1218 = vcmp.lt.s32.totalorder %v1090, 1024
      %vm1219 = vcmp.lt.s32.totalorder %v1091, 1024
      %vm1220 = vcmp.lt.s32.totalorder %v1092, 1024
      %vm1221 = vcmp.lt.s32.totalorder %v1093, 1024
      %vm1222 = vcmp.lt.s32.totalorder %v1094, 1024
      %vm1223 = vcmp.lt.s32.totalorder %v1095, 1024
      %vm1224 = vcmp.lt.s32.totalorder %v1096, 1024
      %vm1225 = vcmp.lt.s32.totalorder %v1097, 1024
      %vm1226 = vcmp.lt.s32.totalorder %v1098, 1024
      %vm1227 = vcmp.lt.s32.totalorder %v1099, 1024
      %vm1228 = vcmp.lt.s32.totalorder %v1100, 1024
      %vm1229 = vcmp.lt.s32.totalorder %v1101, 1024
      %vm1230 = vcmp.lt.s32.totalorder %v1102, 1024
      %vm1231 = vcmp.lt.s32.totalorder %v1103, 1024
      %vm1232 = vcmp.lt.s32.totalorder %v1104, 1024
      %vm1233 = vcmp.lt.s32.totalorder %v1105, 1024
      %vm1234 = vcmp.lt.s32.totalorder %v1106, 1024
      %vm1235 = vcmp.lt.s32.totalorder %v1107, 1024
      %vm1236 = vcmp.lt.s32.totalorder %v1108, 1024
      %vm1237 = vcmp.lt.s32.totalorder %v1109, 1024
      %vm1238 = vcmp.lt.s32.totalorder %v1110, 1024
      %vm1239 = vcmp.lt.s32.totalorder %v1111, 1024
      %vm1240 = vcmp.lt.s32.totalorder %v1112, 1024
      %vm1241 = vcmp.lt.s32.totalorder %v1113, 1024
      %vm1242 = vcmp.lt.s32.totalorder %v1114, 1024
      %v1243 = vsel %vm1115, %v722, 0.0
      %v1244 = vsel %vm1116, %v723, 0.0
      %v1245 = vsel %vm1117, %v724, 0.0
      %v1246 = vsel %vm1118, %v725, 0.0
      %v1247 = vsel %vm1119, %v726, 0.0
      %v1248 = vsel %vm1120, %v727, 0.0
      %v1249 = vsel %vm1121, %v728, 0.0
      %v1250 = vsel %vm1122, %v729, 0.0
      %v1251 = vsel %vm1123, %v730, 0.0
      %v1252 = vsel %vm1124, %v731, 0.0
      %v1253 = vsel %vm1125, %v732, 0.0
      %v1254 = vsel %vm1126, %v733, 0.0
      %v1255 = vsel %vm1127, %v734, 0.0
      %v1256 = vsel %vm1128, %v735, 0.0
      %v1257 = vsel %vm1129, %v736, 0.0
      %v1258 = vsel %vm1130, %v737, 0.0
      %v1259 = vsel %vm1131, %v738, 0.0
      %v1260 = vsel %vm1132, %v739, 0.0
      %v1261 = vsel %vm1133, %v740, 0.0
      %v1262 = vsel %vm1134, %v741, 0.0
      %v1263 = vsel %vm1135, %v742, 0.0
      %v1264 = vsel %vm1136, %v743, 0.0
      %v1265 = vsel %vm1137, %v744, 0.0
      %v1266 = vsel %vm1138, %v745, 0.0
      %v1267 = vsel %vm1139, %v746, 0.0
      %v1268 = vsel %vm1140, %v747, 0.0
      %v1269 = vsel %vm1141, %v748, 0.0
      %v1270 = vsel %vm1142, %v749, 0.0
      %v1271 = vsel %vm1143, %v750, 0.0
      %v1272 = vsel %vm1144, %v751, 0.0
      %v1273 = vsel %vm1145, %v752, 0.0
      %v1274 = vsel %vm1146, %v753, 0.0
      %v1275 = vsel %vm1147, %v754, 0.0
      %v1276 = vsel %vm1148, %v755, 0.0
      %v1277 = vsel %vm1149, %v756, 0.0
      %v1278 = vsel %vm1150, %v757, 0.0
      %v1279 = vsel %vm1151, %v758, 0.0
      %v1280 = vsel %vm1152, %v759, 0.0
      %v1281 = vsel %vm1153, %v760, 0.0
      %v1282 = vsel %vm1154, %v761, 0.0
      %v1283 = vsel %vm1155, %v762, 0.0
      %v1284 = vsel %vm1156, %v763, 0.0
      %v1285 = vsel %vm1157, %v764, 0.0
      %v1286 = vsel %vm1158, %v765, 0.0
      %v1287 = vsel %vm1159, %v766, 0.0
      %v1288 = vsel %vm1160, %v767, 0.0
      %v1289 = vsel %vm1161, %v768, 0.0
      %v1290 = vsel %vm1162, %v769, 0.0
      %v1291 = vsel %vm1163, %v770, 0.0
      %v1292 = vsel %vm1164, %v771, 0.0
      %v1293 = vsel %vm1165, %v772, 0.0
      %v1294 = vsel %vm1166, %v773, 0.0
      %v1295 = vsel %vm1167, %v774, 0.0
      %v1296 = vsel %vm1168, %v775, 0.0
      %v1297 = vsel %vm1169, %v776, 0.0
      %v1298 = vsel %vm1170, %v777, 0.0
      %v1299 = vsel %vm1171, %v778, 0.0
      %v1300 = vsel %vm1172, %v779, 0.0
      %v1301 = vsel %vm1173, %v780, 0.0
      %v1302 = vsel %vm1174, %v781, 0.0
      %v1303 = vsel %vm1175, %v782, 0.0
      %v1304 = vsel %vm1176, %v783, 0.0
      %v1305 = vsel %vm1177, %v784, 0.0
      %v1306 = vsel %vm1178, %v785, 0.0
      %v1307 = vsel %vm1179, %v786, 0.0
      %v1308 = vsel %vm1180, %v787, 0.0
      %v1309 = vsel %vm1181, %v788, 0.0
      %v1310 = vsel %vm1182, %v789, 0.0
      %v1311 = vsel %vm1183, %v790, 0.0
      %v1312 = vsel %vm1184, %v791, 0.0
      %v1313 = vsel %vm1185, %v792, 0.0
      %v1314 = vsel %vm1186, %v793, 0.0
      %v1315 = vsel %vm1187, %v794, 0.0
      %v1316 = vsel %vm1188, %v795, 0.0
      %v1317 = vsel %vm1189, %v796, 0.0
      %v1318 = vsel %vm1190, %v797, 0.0
      %v1319 = vsel %vm1191, %v798, 0.0
      %v1320 = vsel %vm1192, %v799, 0.0
      %v1321 = vsel %vm1193, %v800, 0.0
      %v1322 = vsel %vm1194, %v801, 0.0
      %v1323 = vsel %vm1195, %v802, 0.0
      %v1324 = vsel %vm1196, %v803, 0.0
      %v1325 = vsel %vm1197, %v804, 0.0
      %v1326 = vsel %vm1198, %v805, 0.0
      %v1327 = vsel %vm1199, %v806, 0.0
      %v1328 = vsel %vm1200, %v807, 0.0
      %v1329 = vsel %vm1201, %v808, 0.0
      %v1330 = vsel %vm1202, %v809, 0.0
      %v1331 = vsel %vm1203, %v810, 0.0
      %v1332 = vsel %vm1204, %v811, 0.0
      %v1333 = vsel %vm1205, %v812, 0.0
      %v1334 = vsel %vm1206, %v813, 0.0
      %v1335 = vsel %vm1207, %v814, 0.0
      %v1336 = vsel %vm1208, %v815, 0.0
      %v1337 = vsel %vm1209, %v816, 0.0
      %v1338 = vsel %vm1210, %v817, 0.0
      %v1339 = vsel %vm1211, %v818, 0.0
      %v1340 = vsel %vm1212, %v819, 0.0
      %v1341 = vsel %vm1213, %v820, 0.0
      %v1342 = vsel %vm1214, %v821, 0.0
      %v1343 = vsel %vm1215, %v822, 0.0
      %v1344 = vsel %vm1216, %v823, 0.0
      %v1345 = vsel %vm1217, %v824, 0.0
      %v1346 = vsel %vm1218, %v825, 0.0
      %v1347 = vsel %vm1219, %v826, 0.0
      %v1348 = vsel %vm1220, %v827, 0.0
      %v1349 = vsel %vm1221, %v828, 0.0
      %v1350 = vsel %vm1222, %v829, 0.0
      %v1351 = vsel %vm1223, %v830, 0.0
      %v1352 = vsel %vm1224, %v831, 0.0
      %v1353 = vsel %vm1225, %v832, 0.0
      %v1354 = vsel %vm1226, %v833, 0.0
      %v1355 = vsel %vm1227, %v834, 0.0
      %v1356 = vsel %vm1228, %v835, 0.0
      %v1357 = vsel %vm1229, %v836, 0.0
      %v1358 = vsel %vm1230, %v837, 0.0
      %v1359 = vsel %vm1231, %v838, 0.0
      %v1360 = vsel %vm1232, %v839, 0.0
      %v1361 = vsel %vm1233, %v840, 0.0
      %v1362 = vsel %vm1234, %v841, 0.0
      %v1363 = vsel %vm1235, %v842, 0.0
      %v1364 = vsel %vm1236, %v843, 0.0
      %v1365 = vsel %vm1237, %v844, 0.0
      %v1366 = vsel %vm1238, %v845, 0.0
      %v1367 = vsel %vm1239, %v846, 0.0
      %v1368 = vsel %vm1240, %v847, 0.0
      %v1369 = vsel %vm1241, %v848, 0.0
      %v1370 = vsel %vm1242, %v849, 0.0
      %v1371 = vld [vmem:[#allocation8] sm:$0xff]
      %v1372 = vld [vmem:[#allocation8 + $0x8] sm:$0xff]
      %v1373 = vld [vmem:[#allocation8 + $0x10] sm:$0xff]
      %v1374 = vld [vmem:[#allocation8 + $0x18] sm:$0xff]
      %v1375 = vadd.f32 %v1243, %v1247
      %v1376 = vadd.f32 %v1375, %v1251
      %v1377 = vadd.f32 %v1376, %v1255
      %v1378 = vadd.f32 %v1377, %v1259
      %v1379 = vadd.f32 %v1378, %v1263
      %v1380 = vadd.f32 %v1379, %v1267
      %v1381 = vadd.f32 %v1380, %v1271
      %v1382 = vadd.f32 %v1381, %v1275
      %v1383 = vadd.f32 %v1382, %v1279
      %v1384 = vadd.f32 %v1383, %v1283
      %v1385 = vadd.f32 %v1384, %v1287
      %v1386 = vadd.f32 %v1385, %v1291
      %v1387 = vadd.f32 %v1386, %v1295
      %v1388 = vadd.f32 %v1387, %v1299
      %v1389 = vadd.f32 %v1388, %v1303
      %v1390 = vadd.f32 %v1389, %v1307
      %v1391 = vadd.f32 %v1390, %v1311
      %v1392 = vadd.f32 %v1391, %v1315
      %v1393 = vadd.f32 %v1392, %v1319
      %v1394 = vadd.f32 %v1393, %v1323
      %v1395 = vadd.f32 %v1394, %v1327
      %v1396 = vadd.f32 %v1395, %v1331
      %v1397 = vadd.f32 %v1396, %v1335
      %v1398 = vadd.f32 %v1397, %v1339
      %v1399 = vadd.f32 %v1398, %v1343
      %v1400 = vadd.f32 %v1399, %v1347
      %v1401 = vadd.f32 %v1400, %v1351
      %v1402 = vadd.f32 %v1401, %v1355
      %v1403 = vadd.f32 %v1402, %v1359
      %v1404 = vadd.f32 %v1403, %v1363
      %v1405 = vadd.f32 %v1404, %v1367
      %v1406 = vadd.f32 %v1244, %v1248
      %v1407 = vadd.f32 %v1406, %v1252
      %v1408 = vadd.f32 %v1407, %v1256
      %v1409 = vadd.f32 %v1408, %v1260
      %v1410 = vadd.f32 %v1409, %v1264
      %v1411 = vadd.f32 %v1410, %v1268
      %v1412 = vadd.f32 %v1411, %v1272
      %v1413 = vadd.f32 %v1412, %v1276
      %v1414 = vadd.f32 %v1413, %v1280
      %v1415 = vadd.f32 %v1414, %v1284
      %v1416 = vadd.f32 %v1415, %v1288
      %v1417 = vadd.f32 %v1416, %v1292
      %v1418 = vadd.f32 %v1417, %v1296
      %v1419 = vadd.f32 %v1418, %v1300
      %v1420 = vadd.f32 %v1419, %v1304
      %v1421 = vadd.f32 %v1420, %v1308
      %v1422 = vadd.f32 %v1421, %v1312
      %v1423 = vadd.f32 %v1422, %v1316
      %v1424 = vadd.f32 %v1423, %v1320
      %v1425 = vadd.f32 %v1424, %v1324
      %v1426 = vadd.f32 %v1425, %v1328
      %v1427 = vadd.f32 %v1426, %v1332
      %v1428 = vadd.f32 %v1427, %v1336
      %v1429 = vadd.f32 %v1428, %v1340
      %v1430 = vadd.f32 %v1429, %v1344
      %v1431 = vadd.f32 %v1430, %v1348
      %v1432 = vadd.f32 %v1431, %v1352
      %v1433 = vadd.f32 %v1432, %v1356
      %v1434 = vadd.f32 %v1433, %v1360
      %v1435 = vadd.f32 %v1434, %v1364
      %v1436 = vadd.f32 %v1435, %v1368
      %v1437 = vadd.f32 %v1245, %v1249
      %v1438 = vadd.f32 %v1437, %v1253
      %v1439 = vadd.f32 %v1438, %v1257
      %v1440 = vadd.f32 %v1439, %v1261
      %v1441 = vadd.f32 %v1440, %v1265
      %v1442 = vadd.f32 %v1441, %v1269
      %v1443 = vadd.f32 %v1442, %v1273
      %v1444 = vadd.f32 %v1443, %v1277
      %v1445 = vadd.f32 %v1444, %v1281
      %v1446 = vadd.f32 %v1445, %v1285
      %v1447 = vadd.f32 %v1446, %v1289
      %v1448 = vadd.f32 %v1447, %v1293
      %v1449 = vadd.f32 %v1448, %v1297
      %v1450 = vadd.f32 %v1449, %v1301
      %v1451 = vadd.f32 %v1450, %v1305
      %v1452 = vadd.f32 %v1451, %v1309
      %v1453 = vadd.f32 %v1452, %v1313
      %v1454 = vadd.f32 %v1453, %v1317
      %v1455 = vadd.f32 %v1454, %v1321
      %v1456 = vadd.f32 %v1455, %v1325
      %v1457 = vadd.f32 %v1456, %v1329
      %v1458 = vadd.f32 %v1457, %v1333
      %v1459 = vadd.f32 %v1458, %v1337
      %v1460 = vadd.f32 %v1459, %v1341
      %v1461 = vadd.f32 %v1460, %v1345
      %v1462 = vadd.f32 %v1461, %v1349
      %v1463 = vadd.f32 %v1462, %v1353
      %v1464 = vadd.f32 %v1463, %v1357
      %v1465 = vadd.f32 %v1464, %v1361
      %v1466 = vadd.f32 %v1465, %v1365
      %v1467 = vadd.f32 %v1466, %v1369
      %v1468 = vadd.f32 %v1246, %v1250
      %v1469 = vadd.f32 %v1468, %v1254
      %v1470 = vadd.f32 %v1469, %v1258
      %v1471 = vadd.f32 %v1470, %v1262
      %v1472 = vadd.f32 %v1471, %v1266
      %v1473 = vadd.f32 %v1472, %v1270
      %v1474 = vadd.f32 %v1473, %v1274
      %v1475 = vadd.f32 %v1474, %v1278
      %v1476 = vadd.f32 %v1475, %v1282
      %v1477 = vadd.f32 %v1476, %v1286
      %v1478 = vadd.f32 %v1477, %v1290
      %v1479 = vadd.f32 %v1478, %v1294
      %v1480 = vadd.f32 %v1479, %v1298
      %v1481 = vadd.f32 %v1480, %v1302
      %v1482 = vadd.f32 %v1481, %v1306
      %v1483 = vadd.f32 %v1482, %v1310
      %v1484 = vadd.f32 %v1483, %v1314
      %v1485 = vadd.f32 %v1484, %v1318
      %v1486 = vadd.f32 %v1485, %v1322
      %v1487 = vadd.f32 %v1486, %v1326
      %v1488 = vadd.f32 %v1487, %v1330
      %v1489 = vadd.f32 %v1488, %v1334
      %v1490 = vadd.f32 %v1489, %v1338
      %v1491 = vadd.f32 %v1490, %v1342
      %v1492 = vadd.f32 %v1491, %v1346
      %v1493 = vadd.f32 %v1492, %v1350
      %v1494 = vadd.f32 %v1493, %v1354
      %v1495 = vadd.f32 %v1494, %v1358
      %v1496 = vadd.f32 %v1495, %v1362
      %v1497 = vadd.f32 %v1496, %v1366
      %v1498 = vadd.f32 %v1497, %v1370
      %v1499 = vadd.f32 %v1371, %v1405
      %v1500 = vadd.f32 %v1372, %v1436
      %v1501 = vadd.f32 %v1373, %v1467
      %v1502 = vadd.f32 %v1374, %v1498
      %1503 = vst [vmem:[#allocation8] sm:$0xff] %v1499
      %1504 = vst [vmem:[#allocation8 + $0x8] sm:$0xff] %v1500
      %1505 = vst [vmem:[#allocation8 + $0x10] sm:$0xff] %v1501
      %1506 = vst [vmem:[#allocation8 + $0x18] sm:$0xff] %v1502
    $region33: #{tpu_custom_call.1} parent=1 // pred_fallthru
      _
    %p1507 = scmp.le.s32.totalorder %s852, 1024
    // Predicated region
    $region34: #{tpu_custom_call.1} parent=1 // pred_check
      %p1508 = pneg %p1507
    $region35: #{tpu_custom_call.1} parent=1 // pred_check_branch
      %1510 = sbr.rel (%p1508) target = $region37
    $region36: #{tpu_custom_call.1} parent=1 // pred_region
      %v1511 = vld [vmem:[#allocation8] sm:$0xff]
      %v1512 = vld [vmem:[#allocation8 + $0x8] sm:$0xff]
      %v1513 = vld [vmem:[#allocation8 + $0x10] sm:$0xff]
      %v1514 = vld [vmem:[#allocation8 + $0x18] sm:$0xff]
      %v1515 = vadd.f32 %v722, %v726
      %v1516 = vadd.f32 %v1515, %v730
      %v1517 = vadd.f32 %v1516, %v734
      %v1518 = vadd.f32 %v1517, %v738
      %v1519 = vadd.f32 %v1518, %v742
      %v1520 = vadd.f32 %v1519, %v746
      %v1521 = vadd.f32 %v1520, %v750
      %v1522 = vadd.f32 %v1521, %v754
      %v1523 = vadd.f32 %v1522, %v758
      %v1524 = vadd.f32 %v1523, %v762
      %v1525 = vadd.f32 %v1524, %v766
      %v1526 = vadd.f32 %v1525, %v770
      %v1527 = vadd.f32 %v1526, %v774
      %v1528 = vadd.f32 %v1527, %v778
      %v1529 = vadd.f32 %v1528, %v782
      %v1530 = vadd.f32 %v1529, %v786
      %v1531 = vadd.f32 %v1530, %v790
      %v1532 = vadd.f32 %v1531, %v794
      %v1533 = vadd.f32 %v1532, %v798
      %v1534 = vadd.f32 %v1533, %v802
      %v1535 = vadd.f32 %v1534, %v806
      %v1536 = vadd.f32 %v1535, %v810
      %v1537 = vadd.f32 %v1536, %v814
      %v1538 = vadd.f32 %v1537, %v818
      %v1539 = vadd.f32 %v1538, %v822
      %v1540 = vadd.f32 %v1539, %v826
      %v1541 = vadd.f32 %v1540, %v830
      %v1542 = vadd.f32 %v1541, %v834
      %v1543 = vadd.f32 %v1542, %v838
      %v1544 = vadd.f32 %v1543, %v842
      %v1545 = vadd.f32 %v1544, %v846
      %v1546 = vadd.f32 %v723, %v727
      %v1547 = vadd.f32 %v1546, %v731
      %v1548 = vadd.f32 %v1547, %v735
      %v1549 = vadd.f32 %v1548, %v739
      %v1550 = vadd.f32 %v1549, %v743
      %v1551 = vadd.f32 %v1550, %v747
      %v1552 = vadd.f32 %v1551, %v751
      %v1553 = vadd.f32 %v1552, %v755
      %v1554 = vadd.f32 %v1553, %v759
      %v1555 = vadd.f32 %v1554, %v763
      %v1556 = vadd.f32 %v1555, %v767
      %v1557 = vadd.f32 %v1556, %v771
      %v1558 = vadd.f32 %v1557, %v775
      %v1559 = vadd.f32 %v1558, %v779
      %v1560 = vadd.f32 %v1559, %v783
      %v1561 = vadd.f32 %v1560, %v787
      %v1562 = vadd.f32 %v1561, %v791
      %v1563 = vadd.f32 %v1562, %v795
      %v1564 = vadd.f32 %v1563, %v799
      %v1565 = vadd.f32 %v1564, %v803
      %v1566 = vadd.f32 %v1565, %v807
      %v1567 = vadd.f32 %v1566, %v811
      %v1568 = vadd.f32 %v1567, %v815
      %v1569 = vadd.f32 %v1568, %v819
      %v1570 = vadd.f32 %v1569, %v823
      %v1571 = vadd.f32 %v1570, %v827
      %v1572 = vadd.f32 %v1571, %v831
      %v1573 = vadd.f32 %v1572, %v835
      %v1574 = vadd.f32 %v1573, %v839
      %v1575 = vadd.f32 %v1574, %v843
      %v1576 = vadd.f32 %v1575, %v847
      %v1577 = vadd.f32 %v724, %v728
      %v1578 = vadd.f32 %v1577, %v732
      %v1579 = vadd.f32 %v1578, %v736
      %v1580 = vadd.f32 %v1579, %v740
      %v1581 = vadd.f32 %v1580, %v744
      %v1582 = vadd.f32 %v1581, %v748
      %v1583 = vadd.f32 %v1582, %v752
      %v1584 = vadd.f32 %v1583, %v756
      %v1585 = vadd.f32 %v1584, %v760
      %v1586 = vadd.f32 %v1585, %v764
      %v1587 = vadd.f32 %v1586, %v768
      %v1588 = vadd.f32 %v1587, %v772
      %v1589 = vadd.f32 %v1588, %v776
      %v1590 = vadd.f32 %v1589, %v780
      %v1591 = vadd.f32 %v1590, %v784
      %v1592 = vadd.f32 %v1591, %v788
      %v1593 = vadd.f32 %v1592, %v792
      %v1594 = vadd.f32 %v1593, %v796
      %v1595 = vadd.f32 %v1594, %v800
      %v1596 = vadd.f32 %v1595, %v804
      %v1597 = vadd.f32 %v1596, %v808
      %v1598 = vadd.f32 %v1597, %v812
      %v1599 = vadd.f32 %v1598, %v816
      %v1600 = vadd.f32 %v1599, %v820
      %v1601 = vadd.f32 %v1600, %v824
      %v1602 = vadd.f32 %v1601, %v828
      %v1603 = vadd.f32 %v1602, %v832
      %v1604 = vadd.f32 %v1603, %v836
      %v1605 = vadd.f32 %v1604, %v840
      %v1606 = vadd.f32 %v1605, %v844
      %v1607 = vadd.f32 %v1606, %v848
      %v1608 = vadd.f32 %v725, %v729
      %v1609 = vadd.f32 %v1608, %v733
      %v1610 = vadd.f32 %v1609, %v737
      %v1611 = vadd.f32 %v1610, %v741
      %v1612 = vadd.f32 %v1611, %v745
      %v1613 = vadd.f32 %v1612, %v749
      %v1614 = vadd.f32 %v1613, %v753
      %v1615 = vadd.f32 %v1614, %v757
      %v1616 = vadd.f32 %v1615, %v761
      %v1617 = vadd.f32 %v1616, %v765
      %v1618 = vadd.f32 %v1617, %v769
      %v1619 = vadd.f32 %v1618, %v773
      %v1620 = vadd.f32 %v1619, %v777
      %v1621 = vadd.f32 %v1620, %v781
      %v1622 = vadd.f32 %v1621, %v785
      %v1623 = vadd.f32 %v1622, %v789
      %v1624 = vadd.f32 %v1623, %v793
      %v1625 = vadd.f32 %v1624, %v797
      %v1626 = vadd.f32 %v1625, %v801
      %v1627 = vadd.f32 %v1626, %v805
      %v1628 = vadd.f32 %v1627, %v809
      %v1629 = vadd.f32 %v1628, %v813
      %v1630 = vadd.f32 %v1629, %v817
      %v1631 = vadd.f32 %v1630, %v821
      %v1632 = vadd.f32 %v1631, %v825
      %v1633 = vadd.f32 %v1632, %v829
      %v1634 = vadd.f32 %v1633, %v833
      %v1635 = vadd.f32 %v1634, %v837
      %v1636 = vadd.f32 %v1635, %v841
      %v1637 = vadd.f32 %v1636, %v845
      %v1638 = vadd.f32 %v1637, %v849
      %v1639 = vadd.f32 %v1511, %v1545
      %v1640 = vadd.f32 %v1512, %v1576
      %v1641 = vadd.f32 %v1513, %v1607
      %v1642 = vadd.f32 %v1514, %v1638
      %1643 = vst [vmem:[#allocation8] sm:$0xff] %v1639
      %1644 = vst [vmem:[#allocation8 + $0x8] sm:$0xff] %v1640
      %1645 = vst [vmem:[#allocation8 + $0x10] sm:$0xff] %v1641
      %1646 = vst [vmem:[#allocation8 + $0x18] sm:$0xff] %v1642
    $region37: #{tpu_custom_call.1} parent=1 // pred_fallthru
      _
    // Predicated region
    $region38: #{tpu_custom_call.1} parent=1 // pred_check
      _
    $region39: #{tpu_custom_call.1} parent=1 // pred_check_branch
      %1648 = sbr.rel (0) target = $region41
    $region40: #{tpu_custom_call.1} parent=1 // pred_region
      %s1650 = ssub.s32 512, 512
      %1651 = vsyncadd [#allocation4], %s1650
      %s1652 = sshll.u32 [#allocation8], 4
      %s1653 = int_to_ptr.vmem [resolvable:$true] %s1652
      %1658 = dma.vmem_to_hbm [thread:$0]  %s1653, 512, %s3, [#allocation4], 128, 128, 8
    $region41: #{tpu_custom_call.1} parent=1 // pred_fallthru
      _
    // Predicated region
    $region42: #{tpu_custom_call.1} parent=1 // pred_check
      _
    $region43: #{tpu_custom_call.1} parent=1 // pred_check_branch
      %1660 = sbr.rel (0) target = $region45
    $region44: #{tpu_custom_call.1} parent=1 // pred_region
      %1661 = dma.done [#allocation4], 512
    $region45: #{tpu_custom_call.1} parent=1 // pred_fallthru
      _
    %1662 = vsyncpa [#allocation3], 1
    %1663 = vsyncpa [#allocation6], 1
    %1664 = vsyncpa [#allocation4], 1

</llo_original>
